<compile_context>
chip_gen: v7x
topology: tpu7x:2x2x1
jax: 0.10.0
libtpu: 0.0.40
codegen_flags: <defaults>
</compile_context>

<pallas_src>
import functools
import math

import jax
import jax.numpy as jnp
from jax.experimental import pallas as pl
from jax.experimental.pallas import tpu as pltpu


# ---------------------------------------------------------------------------
# Pass A: fused GroupNorm (stats + affine) + QKV projection.
# One batch element per grid step; x block (1, N, Cp) resident in VMEM.
# ---------------------------------------------------------------------------
def fused_gn_qkv_kernel(x_ref, mcg_ref, mgc_ref, gamma_ref, beta_ref,
                        wqkv_ref, bqkv_ref, qkv_ref, *, row_tile):
    n = x_ref.shape[1]
    cp = x_ref.shape[2]
    nt = n // row_tile

    # -- sweep 1 over rows: per-channel sum / sum-of-squares -----------------
    def stat_body(i, carry):
        s, ss = carry
        start = pl.multiple_of(i * row_tile, row_tile)
        xt = x_ref[0, pl.ds(start, row_tile), :]                    # (tn, Cp) f32
        s = s + jnp.sum(xt, axis=0, keepdims=True)
        ss = ss + jnp.sum(xt * xt, axis=0, keepdims=True)
        return s, ss

    zero = jnp.zeros((1, cp), jnp.float32)
    s, ss = jax.lax.fori_loop(0, nt, stat_body, (zero, zero))

    # group reduce + broadcast back via tiny membership matrices (Cp,G)/(G,Cp)
    g_mean = jnp.dot(s, mcg_ref[...], preferred_element_type=jnp.float32)     # (1, G)
    g_msq = jnp.dot(ss, mcg_ref[...], preferred_element_type=jnp.float32)     # (1, G)
    mean = jnp.dot(g_mean, mgc_ref[...], preferred_element_type=jnp.float32)  # (1, Cp)
    msq = jnp.dot(g_msq, mgc_ref[...], preferred_element_type=jnp.float32)    # (1, Cp)
    var = jnp.maximum(msq - mean * mean, 0.0)               # guard against cancellation
    rstd = jax.lax.rsqrt(var + 1e-6)

    gamma = gamma_ref[...]
    beta = beta_ref[...]
    wqkv = wqkv_ref[...]                                    # (Cp, 3Cp) bf16
    bqkv = bqkv_ref[...]                                    # (1, 3Cp) f32

    # -- sweep 2 over rows: normalize + fused QKV matmul (bf16 MXU, f32 acc) -
    def proj_body(i, _):
        start = pl.multiple_of(i * row_tile, row_tile)
        xt = x_ref[0, pl.ds(start, row_tile), :]                    # (tn, Cp) f32
        hn = (xt - mean) * rstd * gamma + beta
        qkv = jnp.dot(hn.astype(jnp.bfloat16), wqkv,
                      preferred_element_type=jnp.float32) + bqkv    # (tn, 3Cp) f32
        qkv_ref[0, pl.ds(start, row_tile), :] = qkv.astype(qkv_ref.dtype)
        return 0

    jax.lax.fori_loop(0, nt, proj_body, 0)


# ---------------------------------------------------------------------------
# Pass B: flash attention (online softmax) + output projection + residual.
# K/V are full-N VMEM-resident blocks; kv tiles sliced in-kernel.
# ---------------------------------------------------------------------------
def flash_attn_kernel(x_ref, q_ref, k_ref, v_ref, wp_ref, bp_ref, out_ref,
                      m_sc, l_sc, acc_sc, *, kv_tile):
    ki = pl.program_id(2)

    @pl.when(ki == 0)
    def _():
        m_sc[...] = jnp.full_like(m_sc, -jnp.inf)
        l_sc[...] = jnp.zeros_like(l_sc)
        acc_sc[...] = jnp.zeros_like(acc_sc)

    q = q_ref[0]                                            # (tq, Cp) bf16, pre-scaled by 1/sqrt(C)
    start = pl.multiple_of(ki * kv_tile, kv_tile)
    k = k_ref[0, pl.ds(start, kv_tile), :]                  # (tk, Cp) bf16 (VMEM-resident K)
    v = v_ref[0, pl.ds(start, kv_tile), :]                  # (tk, Cp) bf16 (VMEM-resident V)

    # contraction on channels expressed directly (no explicit host-side transpose)
    s = jax.lax.dot_general(q, k, (((1,), (1,)), ((), ())),
                            preferred_element_type=jnp.float32)              # (tq, tk) f32

    m_prev = m_sc[...]
    m_new = jnp.maximum(m_prev, jnp.max(s, axis=-1, keepdims=True))
    alpha = jnp.exp(m_prev - m_new)
    p = jnp.exp(s - m_new)                                  # f32
    l_sc[...] = alpha * l_sc[...] + jnp.sum(p, axis=-1, keepdims=True)
    acc_sc[...] = alpha * acc_sc[...] + jnp.dot(
        p.astype(jnp.bfloat16), v, preferred_element_type=jnp.float32)
    m_sc[...] = m_new

    @pl.when(ki == pl.num_programs(2) - 1)
    def _():
        o = acc_sc[...] * pl.reciprocal(l_sc[...], approx=True)              # (tq, Cp) f32
        proj = jnp.dot(o.astype(jnp.bfloat16), wp_ref[...],
                       preferred_element_type=jnp.float32) + bp_ref[...]
        out_ref[0] = (x_ref[0] + proj).astype(out_ref.dtype)


# ---------------------------------------------------------------------------
# Wrapper
# ---------------------------------------------------------------------------
def _pick_tile(n, candidates):
    for t in candidates:
        if n % t == 0:
            return t
    return n


def attn_block(x_nchw, params, num_groups=32):
    """x_nchw: (B, C, H, W) float32. Returns (B, C, H, W) float32."""
    b, c, hgt, wid = x_nchw.shape
    assert c % num_groups == 0
    n = hgt * wid
    cg = c // num_groups
    g = num_groups

    # pad channels to a 128-lane multiple -> lane-dense stores, full MXU contraction
    cp = max(128, ((c + 127) // 128) * 128)
    pad_c = cp - c

    # kernel layout: (B, N, Cp), channels last (lane dim)
    x = jnp.transpose(x_nchw, (0, 2, 3, 1)).reshape(b, n, c).astype(jnp.float32)
    if pad_c:
        x = jnp.pad(x, ((0, 0), (0, 0), (0, pad_c)))

    def pad_mat(w):          # (c, c) -> (cp, cp), zero-padded rows & cols
        return jnp.pad(w, ((0, pad_c), (0, pad_c)))

    def pad_vec(v):          # (c,) -> (cp,)
        return jnp.pad(v, (0, pad_c))

    # group membership matrices; padded channels have zero membership so they neither
    # contribute to nor receive group statistics (their gamma/beta are 0 -> output 0)
    grp = jnp.arange(c) // cg
    member = (grp[:, None] == jnp.arange(g)[None, :]).astype(jnp.float32)    # (c, G)
    member = jnp.pad(member, ((0, pad_c), (0, 0)))                           # (cp, G)
    m_cg = member / jnp.float32(n * cg)        # fold 1/count -> group dot yields E[.]
    m_gc = member.T                            # (G, cp)

    # fused QKV weights (bf16 MXU operands); attention scale folded into Wq / bq
    scale = 1.0 / math.sqrt(c)
    wqkv = jnp.concatenate(
        [pad_mat(params["wq"] * scale).T, pad_mat(params["wk"]).T, pad_mat(params["wv"]).T],
        axis=1).astype(jnp.bfloat16)                                         # (cp, 3cp)
    bqkv = jnp.concatenate(
        [pad_vec(params["bq"] * scale), pad_vec(params["bk"]), pad_vec(params["bv"])]
    ).reshape(1, 3 * cp).astype(jnp.float32)                                 # (1, 3cp)
    gamma = pad_vec(params["gn_w"]).reshape(1, cp).astype(jnp.float32)
    beta = pad_vec(params["gn_b"]).reshape(1, cp).astype(jnp.float32)
    wp = pad_mat(params["wp"]).T.astype(jnp.bfloat16)                        # (cp, cp)
    bp = pad_vec(params["bp"]).reshape(1, cp).astype(jnp.float32)

    # tile sizes (128-multiples where N allows; block == full dim is the legal fallback)
    tn = _pick_tile(n, (512, 256, 128))        # row tile inside pass A
    tq = _pick_tile(n, (256, 128))             # q tile in pass B
    tk = _pick_tile(n, (512, 256, 128))        # kv tile in pass B
    nq, nk = n // tq, n // tk

    mib = 1 << 20
    vmem_cap = 48 * mib                        # headroom under v7x's 64 MiB physical VMEM

    # ---- pass A: GroupNorm + fused QKV (x read from HBM once per batch element) ----
    vmem_a = min(vmem_cap,
                 2 * (n * cp * 4                    # x block (f32), double-buffered
                      + n * 3 * cp * 2              # qkv out block (bf16)
                      + cp * g * 4 + g * cp * 4     # membership matrices
                      + 2 * cp * 4                  # gamma / beta
                      + cp * 3 * cp * 2             # Wqkv (bf16)
                      + 3 * cp * 4)                 # bqkv
                 + 8 * tn * cp * 4                  # in-kernel row-tile intermediates
                 + 4 * mib)

    qkv = pl.pallas_call(
        functools.partial(fused_gn_qkv_kernel, row_tile=tn),
        out_shape=jax.ShapeDtypeStruct((b, n, 3 * cp), jnp.bfloat16),
        grid_spec=pltpu.PrefetchScalarGridSpec(
            num_scalar_prefetch=0,
            grid=(b,),
            in_specs=[
                pl.BlockSpec((1, n, cp), lambda bi: (bi, 0, 0)),       # x
                pl.BlockSpec((cp, g), lambda bi: (0, 0)),              # m_cg
                pl.BlockSpec((g, cp), lambda bi: (0, 0)),              # m_gc
                pl.BlockSpec((1, cp), lambda bi: (0, 0)),              # gamma
                pl.BlockSpec((1, cp), lambda bi: (0, 0)),              # beta
                pl.BlockSpec((cp, 3 * cp), lambda bi: (0, 0)),         # Wqkv (bf16)
                pl.BlockSpec((1, 3 * cp), lambda bi: (0, 0)),          # bqkv
            ],
            out_specs=pl.BlockSpec((1, n, 3 * cp), lambda bi: (bi, 0, 0)),
        ),
        compiler_params=pltpu.CompilerParams(
            dimension_semantics=("parallel",),
            vmem_limit_bytes=vmem_a),
    )(x, m_cg, m_gc, gamma, beta, wqkv, bqkv)

    # ---- pass B: flash attention + projection + residual ------------------
    # K/V full-N blocks: their block index only changes with the batch axis, so each is
    # DMA'd from HBM exactly once per batch element (no per-q-tile re-streaming).
    vmem_c = min(vmem_cap,
                 2 * (tq * cp * 4                   # x residual tile (f32)
                      + tq * cp * 2                 # q tile (bf16)
                      + 2 * n * cp * 2              # K + V resident blocks (bf16)
                      + cp * cp * 2 + cp * 4        # Wp / bp
                      + tq * cp * 4)                # out tile (f32)
                 + tq * cp * 4 + 2 * tq * 4         # acc / m / l scratch
                 + 6 * tq * tk * 4                  # s / p intermediates
                 + 4 * mib)

    x_spec = pl.BlockSpec((1, tq, cp), lambda bi, qi, ki: (bi, qi, 0))
    q_spec = pl.BlockSpec((1, tq, cp), lambda bi, qi, ki: (bi, qi, 0))   # qkv cols [0, Cp)
    k_spec = pl.BlockSpec((1, n, cp), lambda bi, qi, ki: (bi, 0, 1))     # qkv cols [Cp, 2Cp)
    v_spec = pl.BlockSpec((1, n, cp), lambda bi, qi, ki: (bi, 0, 2))     # qkv cols [2Cp, 3Cp)

    out = pl.pallas_call(
        functools.partial(flash_attn_kernel, kv_tile=tk),
        out_shape=jax.ShapeDtypeStruct((b, n, cp), jnp.float32),
        grid_spec=pltpu.PrefetchScalarGridSpec(
            num_scalar_prefetch=0,
            grid=(b, nq, nk),
            in_specs=[
                x_spec,                                                # x (residual)
                q_spec,                                                # q
                k_spec,                                                # K (resident)
                v_spec,                                                # V (resident)
                pl.BlockSpec((cp, cp), lambda bi, qi, ki: (0, 0)),     # Wp (bf16)
                pl.BlockSpec((1, cp), lambda bi, qi, ki: (0, 0)),      # bp
            ],
            out_specs=pl.BlockSpec((1, tq, cp), lambda bi, qi, ki: (bi, qi, 0)),
            scratch_shapes=[pltpu.VMEM((tq, 1), jnp.float32),          # m
                            pltpu.VMEM((tq, 1), jnp.float32),          # l
                            pltpu.VMEM((tq, cp), jnp.float32)],        # acc
        ),
        compiler_params=pltpu.CompilerParams(
            dimension_semantics=("parallel", "parallel", "arbitrary"),
            vmem_limit_bytes=vmem_c),
    )(x, qkv, qkv, qkv, wp, bp)

    # drop channel padding, back to NCHW
    out = out[:, :, :c].reshape(b, hgt, wid, c)
    return jnp.transpose(out, (0, 3, 1, 2))


# ---------------------------------------------------------------------------
# Pure-JAX reference mirroring the PyTorch forward (NCHW)
# ---------------------------------------------------------------------------
def attn_block_reference(x, params, num_groups=32):
    b, c, h, w = x.shape
    cg = c // num_groups
    xr = x.reshape(b, num_groups, cg, h, w)
    mean = xr.mean(axis=(2, 3, 4), keepdims=True)
    var = xr.var(axis=(2, 3, 4), keepdims=True)
    hn = ((xr - mean) / jnp.sqrt(var + 1e-6)).reshape(b, c, h, w)
    hn = hn * params["gn_w"][None, :, None, None] + params["gn_b"][None, :, None, None]

    def conv1x1(t, wgt, bias):
        return jnp.einsum("oc,bchw->bohw", wgt, t) + bias[None, :, None, None]

    q = conv1x1(hn, params["wq"], params["bq"]).reshape(b, c, h * w)
    k = conv1x1(hn, params["wk"], params["bk"]).reshape(b, c, h * w)
    v = conv1x1(hn, params["wv"], params["bv"]).reshape(b, c, h * w)
    q = jnp.transpose(q, (0, 2, 1))                                   # (b, hw, c)
    w_ = jnp.einsum("bic,bcj->bij", q, k) * (int(c) ** (-0.5))
    w_ = jax.nn.softmax(w_, axis=2)
    h_ = jnp.einsum("bcj,bij->bci", v, w_).reshape(b, c, h, w)
    h_ = conv1x1(h_, params["wp"], params["bp"])
    return x + h_


def make_params(key, c):
    ks = jax.random.split(key, 10)
    scale = 1.0 / math.sqrt(c)
    return {
        "gn_w": jax.random.normal(ks[0], (c,), jnp.float32) * 0.1 + 1.0,
        "gn_b": jax.random.normal(ks[1], (c,), jnp.float32) * 0.1,
        "wq": jax.random.normal(ks[2], (c, c), jnp.float32) * scale,
        "bq": jax.random.normal(ks[3], (c,), jnp.float32) * 0.01,
        "wk": jax.random.normal(ks[4], (c, c), jnp.float32) * scale,
        "bk": jax.random.normal(ks[5], (c,), jnp.float32) * 0.01,
        "wv": jax.random.normal(ks[6], (c, c), jnp.float32) * scale,
        "bv": jax.random.normal(ks[7], (c,), jnp.float32) * 0.01,
        "wp": jax.random.normal(ks[8], (c, c), jnp.float32) * scale,
        "bp": jax.random.normal(ks[9], (c,), jnp.float32) * 0.01,
    }


if __name__ == "__main__":
    # C must be divisible by num_groups=32 (C=64 exercises the 128-lane padding path);
    # N = H*W = 1024 exercises the internal row-tile loop and the multi-tile flash grid.
    B, C, H, W = 2, 64, 32, 32
    key = jax.random.PRNGKey(0)
    kx, kp = jax.random.split(key)
    x = jax.random.normal(kx, (B, C, H, W), jnp.float32)
    params = make_params(kp, C)

    out = jax.block_until_ready(attn_block(x, params))
    ref = attn_block_reference(x, params)

    assert out.shape == (B, C, H, W)
    max_err = float(jnp.max(jnp.abs(out - ref)))
    # bf16 MXU operands -> looser tolerance than pure-f32; f32 accumulation keeps it tight.
    assert jnp.allclose(out, ref, atol=5e-2, rtol=5e-2), max_err

    print("KERNEL_OK")
</pallas_src>

<mosaic_0001>
module attributes {stable_mosaic.version = 11 : i64} {
  func.func @fused_gn_qkv_kernel(%arg0: i32, %arg1: memref<1x1024x128xf32, #tpu.memory_space<vmem>>, %arg2: memref<128x32xf32, #tpu.memory_space<vmem>>, %arg3: memref<32x128xf32, #tpu.memory_space<vmem>>, %arg4: memref<1x128xf32, #tpu.memory_space<vmem>>, %arg5: memref<1x128xf32, #tpu.memory_space<vmem>>, %arg6: memref<128x384xbf16, #tpu.memory_space<vmem>>, %arg7: memref<1x384xf32, #tpu.memory_space<vmem>>, %arg8: memref<1x1024x384xbf16, #tpu.memory_space<vmem>>) attributes {dimension_semantics = [#tpu.dimension_semantics<parallel>], iteration_bounds = array<i64: 2>, scalar_prefetch = 0 : i64, scratch_operands = 0 : i64, tpu.core_type = #tpu.core_type<tc>, window_params = [{transform_indices = @transform_0, window_bounds = array<i64: 1, 1024, 128>}, {pipeline_mode = #tpu.pipeline_mode<synchronous>, transform_indices = @transform_1, window_bounds = array<i64: 128, 32>}, {pipeline_mode = #tpu.pipeline_mode<synchronous>, transform_indices = @transform_2, window_bounds = array<i64: 32, 128>}, {pipeline_mode = #tpu.pipeline_mode<synchronous>, transform_indices = @transform_3, window_bounds = array<i64: 1, 128>}, {pipeline_mode = #tpu.pipeline_mode<synchronous>, transform_indices = @transform_4, window_bounds = array<i64: 1, 128>}, {pipeline_mode = #tpu.pipeline_mode<synchronous>, transform_indices = @transform_5, window_bounds = array<i64: 128, 384>}, {pipeline_mode = #tpu.pipeline_mode<synchronous>, transform_indices = @transform_6, window_bounds = array<i64: 1, 384>}, {transform_indices = @transform_7, window_bounds = array<i64: 1, 1024, 384>}]} {
    %cst = arith.constant 0.000000e+00 : f32
    %0 = vector.broadcast %cst : f32 to vector<1x128xf32>
    %c0_i32 = arith.constant 0 : i32
    %c2_i32 = arith.constant 2 : i32
    %1 = arith.addi %c0_i32, %c2_i32 : i32
    %c1_i32 = arith.constant 1 : i32
    %2:2 = scf.for %arg9 = %c0_i32 to %1 step %c1_i32 iter_args(%arg10 = %0, %arg11 = %0) -> (vector<1x128xf32>, vector<1x128xf32>)  : i32 {
      %c512_i32 = arith.constant 512 : i32
      %23 = arith.muli %arg9, %c512_i32 : i32
      %24 = tpu.assume_multiple %23, 512 : i32
      %c0_26 = arith.constant 0 : index
      %25 = arith.index_cast %24 : i32 to index
      %c0_27 = arith.constant 0 : index
      %26 = vector.load %arg1[%c0_26, %25, %c0_27] : memref<1x1024x128xf32, #tpu.memory_space<vmem>>, vector<1x512x128xf32>
      %27 = vector.shape_cast %26 : vector<1x512x128xf32> to vector<512x128xf32>
      %cst_28 = arith.constant dense<0.000000e+00> : vector<128xf32>
      %28 = vector.multi_reduction <add>, %27, %cst_28 [0] : vector<512x128xf32> to vector<128xf32>
      %29 = vector.shape_cast %28 : vector<128xf32> to vector<1x128xf32>
      %30 = arith.addf %arg10, %29 : vector<1x128xf32>
      %31 = arith.mulf %27, %27 : vector<512x128xf32>
      %cst_29 = arith.constant dense<0.000000e+00> : vector<128xf32>
      %32 = vector.multi_reduction <add>, %31, %cst_29 [0] : vector<512x128xf32> to vector<128xf32>
      %33 = vector.shape_cast %32 : vector<128xf32> to vector<1x128xf32>
      %34 = arith.addf %arg11, %33 : vector<1x128xf32>
      scf.yield %30, %34 : vector<1x128xf32>, vector<1x128xf32>
    }
    %c2_i32_0 = arith.constant 2 : i32
    %c0 = arith.constant 0 : index
    %c0_1 = arith.constant 0 : index
    %3 = vector.load %arg2[%c0, %c0_1] : memref<128x32xf32, #tpu.memory_space<vmem>>, vector<128x32xf32>
    %cst_2 = arith.constant dense<0.000000e+00> : vector<1x32xf32>
    %4 = tpu.matmul %2#0, %3, %cst_2 {dimension_numbers = #tpu.dot_dimension_numbers<[1], [0], [0], [1], [0, 0, 1, 1], [], []>} : vector<1x128xf32>, vector<128x32xf32>, vector<1x32xf32> -> vector<1x32xf32>
    %c0_3 = arith.constant 0 : index
    %c0_4 = arith.constant 0 : index
    %5 = vector.load %arg2[%c0_3, %c0_4] : memref<128x32xf32, #tpu.memory_space<vmem>>, vector<128x32xf32>
    %cst_5 = arith.constant dense<0.000000e+00> : vector<1x32xf32>
    %6 = tpu.matmul %2#1, %5, %cst_5 {dimension_numbers = #tpu.dot_dimension_numbers<[1], [0], [0], [1], [0, 0, 1, 1], [], []>} : vector<1x128xf32>, vector<128x32xf32>, vector<1x32xf32> -> vector<1x32xf32>
    %c0_6 = arith.constant 0 : index
    %c0_7 = arith.constant 0 : index
    %7 = vector.load %arg3[%c0_6, %c0_7] : memref<32x128xf32, #tpu.memory_space<vmem>>, vector<32x128xf32>
    %cst_8 = arith.constant dense<0.000000e+00> : vector<1x128xf32>
    %8 = tpu.matmul %4, %7, %cst_8 {dimension_numbers = #tpu.dot_dimension_numbers<[1], [0], [0], [1], [0, 0, 1, 1], [], []>} : vector<1x32xf32>, vector<32x128xf32>, vector<1x128xf32> -> vector<1x128xf32>
    %c0_9 = arith.constant 0 : index
    %c0_10 = arith.constant 0 : index
    %9 = vector.load %arg3[%c0_9, %c0_10] : memref<32x128xf32, #tpu.memory_space<vmem>>, vector<32x128xf32>
    %cst_11 = arith.constant dense<0.000000e+00> : vector<1x128xf32>
    %10 = tpu.matmul %6, %9, %cst_11 {dimension_numbers = #tpu.dot_dimension_numbers<[1], [0], [0], [1], [0, 0, 1, 1], [], []>} : vector<1x32xf32>, vector<32x128xf32>, vector<1x128xf32> -> vector<1x128xf32>
    %11 = arith.mulf %8, %8 : vector<1x128xf32>
    %12 = arith.subf %10, %11 : vector<1x128xf32>
    %cst_12 = arith.constant 0.000000e+00 : f32
    %13 = vector.broadcast %cst_12 : f32 to vector<1x128xf32>
    %14 = arith.maximumf %12, %13 : vector<1x128xf32>
    %cst_13 = arith.constant 9.99999997E-7 : f32
    %15 = vector.broadcast %cst_13 : f32 to vector<1x128xf32>
    %16 = arith.addf %14, %15 : vector<1x128xf32>
    %17 = math.rsqrt %16 : vector<1x128xf32>
    %c0_14 = arith.constant 0 : index
    %c0_15 = arith.constant 0 : index
    %18 = vector.load %arg4[%c0_14, %c0_15] : memref<1x128xf32, #tpu.memory_space<vmem>>, vector<1x128xf32>
    %c0_16 = arith.constant 0 : index
    %c0_17 = arith.constant 0 : index
    %19 = vector.load %arg5[%c0_16, %c0_17] : memref<1x128xf32, #tpu.memory_space<vmem>>, vector<1x128xf32>
    %c0_18 = arith.constant 0 : index
    %c0_19 = arith.constant 0 : index
    %20 = vector.load %arg6[%c0_18, %c0_19] : memref<128x384xbf16, #tpu.memory_space<vmem>>, vector<128x384xbf16>
    %c0_20 = arith.constant 0 : index
    %c0_21 = arith.constant 0 : index
    %21 = vector.load %arg7[%c0_20, %c0_21] : memref<1x384xf32, #tpu.memory_space<vmem>>, vector<1x384xf32>
    %c0_i32_22 = arith.constant 0 : i32
    %c2_i32_23 = arith.constant 2 : i32
    %22 = arith.addi %c0_i32_22, %c2_i32_23 : i32
    %c1_i32_24 = arith.constant 1 : i32
    scf.for %arg9 = %c0_i32_22 to %22 step %c1_i32_24  : i32 {
      %c512_i32 = arith.constant 512 : i32
      %23 = arith.muli %arg9, %c512_i32 : i32
      %24 = tpu.assume_multiple %23, 512 : i32
      %c0_26 = arith.constant 0 : index
      %25 = arith.index_cast %24 : i32 to index
      %c0_27 = arith.constant 0 : index
      %26 = vector.load %arg1[%c0_26, %25, %c0_27] : memref<1x1024x128xf32, #tpu.memory_space<vmem>>, vector<1x512x128xf32>
      %27 = vector.shape_cast %26 : vector<1x512x128xf32> to vector<512x128xf32>
      %28 = vector.broadcast %8 : vector<1x128xf32> to vector<512x128xf32>
      %29 = arith.subf %27, %28 : vector<512x128xf32>
      %30 = vector.broadcast %17 : vector<1x128xf32> to vector<512x128xf32>
      %31 = arith.mulf %29, %30 : vector<512x128xf32>
      %32 = vector.broadcast %18 : vector<1x128xf32> to vector<512x128xf32>
      %33 = arith.mulf %31, %32 : vector<512x128xf32>
      %34 = vector.broadcast %19 : vector<1x128xf32> to vector<512x128xf32>
      %35 = arith.addf %33, %34 : vector<512x128xf32>
      %36 = arith.truncf %35 : vector<512x128xf32> to vector<512x128xbf16>
      %cst_28 = arith.constant dense<0.000000e+00> : vector<512x384xf32>
      %37 = tpu.matmul %36, %20, %cst_28 {dimension_numbers = #tpu.dot_dimension_numbers<[1], [0], [0], [1], [0, 0, 1, 1], [], []>} : vector<512x128xbf16>, vector<128x384xbf16>, vector<512x384xf32> -> vector<512x384xf32>
      %38 = vector.broadcast %21 : vector<1x384xf32> to vector<512x384xf32>
      %39 = arith.addf %37, %38 : vector<512x384xf32>
      %40 = arith.truncf %39 : vector<512x384xf32> to vector<512x384xbf16>
      %c0_29 = arith.constant 0 : index
      %41 = arith.index_cast %24 : i32 to index
      %c0_30 = arith.constant 0 : index
      %42 = vector.load %arg8[%c0_29, %41, %c0_30] : memref<1x1024x384xbf16, #tpu.memory_space<vmem>>, vector<1x512x384xbf16>
      %43 = vector.shape_cast %42 : vector<1x512x384xbf16> to vector<512x384xbf16>
      %44 = vector.shape_cast %40 : vector<512x384xbf16> to vector<1x512x384xbf16>
      tpu.vector_store %arg8[%c0_29, %41, %c0_30], %44 {strides = array<i32>} : memref<1x1024x384xbf16, #tpu.memory_space<vmem>>, vector<1x512x384xbf16>,
    }
    %c2_i32_25 = arith.constant 2 : i32
    return
  }
  func.func @transform_0(%arg0: i32) -> (i32, i32, i32) {
    %c0_i32 = arith.constant 0 : i32
    %c0_i32_0 = arith.constant 0 : i32
    %c0_i32_1 = arith.constant 0 : i32
    return %arg0, %c0_i32, %c0_i32_0 : i32, i32, i32
  }
  func.func @transform_1(%arg0: i32) -> (i32, i32) {
    %c0_i32 = arith.constant 0 : i32
    %c0_i32_0 = arith.constant 0 : i32
    %c0_i32_1 = arith.constant 0 : i32
    return %c0_i32, %c0_i32_0 : i32, i32
  }
  func.func @transform_2(%arg0: i32) -> (i32, i32) {
    %c0_i32 = arith.constant 0 : i32
    %c0_i32_0 = arith.constant 0 : i32
    %c0_i32_1 = arith.constant 0 : i32
    return %c0_i32, %c0_i32_0 : i32, i32
  }
  func.func @transform_3(%arg0: i32) -> (i32, i32) {
    %c0_i32 = arith.constant 0 : i32
    %c0_i32_0 = arith.constant 0 : i32
    %c0_i32_1 = arith.constant 0 : i32
    return %c0_i32, %c0_i32_0 : i32, i32
  }
  func.func @transform_4(%arg0: i32) -> (i32, i32) {
    %c0_i32 = arith.constant 0 : i32
    %c0_i32_0 = arith.constant 0 : i32
    %c0_i32_1 = arith.constant 0 : i32
    return %c0_i32, %c0_i32_0 : i32, i32
  }
  func.func @transform_5(%arg0: i32) -> (i32, i32) {
    %c0_i32 = arith.constant 0 : i32
    %c0_i32_0 = arith.constant 0 : i32
    %c0_i32_1 = arith.constant 0 : i32
    return %c0_i32, %c0_i32_0 : i32, i32
  }
  func.func @transform_6(%arg0: i32) -> (i32, i32) {
    %c0_i32 = arith.constant 0 : i32
    %c0_i32_0 = arith.constant 0 : i32
    %c0_i32_1 = arith.constant 0 : i32
    return %c0_i32, %c0_i32_0 : i32, i32
  }
  func.func @transform_7(%arg0: i32) -> (i32, i32, i32) {
    %c0_i32 = arith.constant 0 : i32
    %c0_i32_0 = arith.constant 0 : i32
    %c0_i32_1 = arith.constant 0 : i32
    return %arg0, %c0_i32, %c0_i32_0 : i32, i32, i32
  }
}

</mosaic_0001>

<llo_original>
// kernel: tpu_custom_call.1
$region0: #{tpu_custom_call.1}
  #allocation0 [shape = 'u32[]', space=smem, size = 0x4, offset = 0x4, fixed_abs, tag = 'smem constant byte address 0x4 - core index']
  #allocation1 [shape = 'u32[144,128]{1,0:T(1,128)}', space=vmem, size = 0x12000, scoped, tag = 'internal scratch']
  %s0 = inlined_call_operand.hbm [shape: f32[2,1024,128], index: 0, kind: input, shape index: {}]
  %s1 = inlined_call_operand.vmem [shape: f32[128,32], index: 1, kind: input, shape index: {}]
  %s2 = inlined_call_operand.hbm [shape: f32[32,128], index: 2, kind: input, shape index: {}]
  %s3 = inlined_call_operand.hbm [shape: f32[1,128], index: 3, kind: input, shape index: {}]
  %s4 = inlined_call_operand.hbm [shape: f32[1,128], index: 4, kind: input, shape index: {}]
  %s5 = inlined_call_operand.hbm [shape: bf16[128,384], index: 5, kind: input, shape index: {}]
  %s6 = inlined_call_operand.hbm [shape: f32[1,384], index: 6, kind: input, shape index: {}]
  %s7 = inlined_call_operand.hbm [shape: bf16[2,1024,384], index: 7, kind: output, shape index: {}]
  %s8 = sld [smem:[#allocation0]]
  $region99: #{tpu_custom_call.1} parent=0
    _
  %s10 = ssub.s32 1, %s8
  %s11 = scalar_select 0, %s10, %s8
  $region1: #{tpu_custom_call.1} parent=0
    #allocation2 [shape = 'u8[1048576]{0}', space=vmem, size = 0x100000, scoped, tag = 'input window, operand 0']
    #allocation3 [shape = 's32[2]{0}', space=sflag, size = 0x8, scoped, tag = 'scoped memory for tpu_custom_call.1']
    #allocation4 [shape = 's32[2]{0}', space=sflag, size = 0x8, scoped, tag = 'scoped memory for tpu_custom_call.1']
    #allocation5 [shape = 'u8[16384]{0}', space=vmem, size = 0x4000, scoped, tag = 'input window, operand 2, single buffered']
    #allocation6 [shape = 's32[1]{0}', space=sflag, size = 0x4, scoped, tag = 'scoped memory for tpu_custom_call.1']
    #allocation7 [shape = 'u8[512]{0}', space=vmem, size = 0x400, scoped, tag = 'input window, operand 3, single buffered']
    #allocation8 [shape = 'u8[512]{0}', space=vmem, size = 0x400, scoped, tag = 'input window, operand 4, single buffered']
    #allocation9 [shape = 's32[1]{0}', space=sflag, size = 0x4, scoped, tag = 'scoped memory for tpu_custom_call.1']
    #allocation10 [shape = 'u8[98304]{0}', space=vmem, size = 0x18000, scoped, tag = 'input window, operand 5, single buffered']
    #allocation11 [shape = 'u8[1536]{0}', space=vmem, size = 0x800, scoped, tag = 'input window, operand 6, single buffered']
    #allocation12 [shape = 's32[1]{0}', space=sflag, size = 0x4, scoped, tag = 'scoped memory for tpu_custom_call.1']
    #allocation13 [shape = 'u8[1572864]{0}', space=vmem, size = 0x180000, scoped, tag = 'output window, operand 0']
    %12 = vsyncpa [#allocation3], 0
    %s13 = scalar_lea.sflag [#allocation3], 1
    %14 = vsyncpa %s13, 0
    %15 = vsyncpa [#allocation6], 0
    %16 = vsyncpa [#allocation9], 0
    %17 = vsyncpa [#allocation12], 0
    %18 = vsyncpa [#allocation4], 0
    %s19 = scalar_lea.sflag [#allocation4], 1
    %20 = vsyncpa %s19, 0
    loop: start=0, step=1, limit=4
    $region2: #{tpu_custom_call.1} parent=1 // loop_pre_header
      _
    $region3: #{tpu_custom_call.1} parent=1 // loop_header
      %s22 = sphi 0, %s26
      %p23 = scmp.ge.s32.totalorder %s22, 4
      %s32 = sphi 0, %s34
      %s35 = sphi 0, %s32
      %s36 = sphi 0, %s35
      %s52 = sphi 0, %s36
      %s56 = sphi 0, %s56
      %s58 = sphi 0, %s56
      %s59 = sphi 0, %s58
      %s73 = sphi 0, %s59
      %s77 = sphi 0, %s77
      %s79 = sphi 0, %s77
      %s80 = sphi 0, %s79
      %s94 = sphi 0, %s80
      %s98 = sphi 0, %s98
      %s100 = sphi 0, %s98
      %s101 = sphi 0, %s100
      %s115 = sphi 0, %s101
      %s119 = sphi 0, %s119
      %s121 = sphi 0, %s119
      %s122 = sphi 0, %s121
      %s136 = sphi 0, %s122
      %s140 = sphi 0, %s140
      %s142 = sphi 0, %s140
      %s143 = sphi 0, %s142
      %s157 = sphi 0, %s143
      %s161 = sphi 0, %s161
      %s163 = sphi 0, %s161
      %s164 = sphi 0, %s163
      %s178 = sphi 0, %s164
      %s184 = sphi 0, %s186
      %s187 = sphi 0, %s184
      %s188 = sphi 0, %s187
      %s204 = sphi 0, %s188
    $region4: #{tpu_custom_call.1} parent=1 // loop_header_branch
      %25 = sbr.rel (%p23) target = $region8
    $region5: #{tpu_custom_call.1} parent=1 // loop_body
      %s27 = ssub.s32 %s22, 1
      %s28 = ssub.s32 %s22, 2
      %s29 = sadd.s32 %s22, 1
      %s30 = ssub.s32 %s22, %s29
      %p31 = scmp.eq.s32.totalorder %s30, 0
      %s33 = sadd.s32 %s32, 1
      %s34 = scalar_select %p31, %s32, %s33
      %p37 = pneg %p31
      %p38 = scmp.eq.s32.totalorder %s22, 1
      %p39 = por %p37, %p38
      %p40 = scmp.ne.s32.totalorder %s32, %s35
      %p41 = scmp.eq.s32.totalorder %s22, 0
      %p42 = por %p40, %p41
      %p43 = scmp.ne.s32.totalorder %s32, %s35
      %p44 = scmp.eq.s32.totalorder %s27, 1
      %p45 = por %p43, %p44
      %p46 = scmp.ne.s32.totalorder %s35, %s36
      %p47 = scmp.eq.s32.totalorder %s27, 0
      %p48 = por %p46, %p47
      %p49 = scmp.ne.s32.totalorder %s35, %s36
      %p50 = scmp.eq.s32.totalorder %s28, 1
      %p51 = por %p49, %p50
      %p53 = scmp.ne.s32.totalorder %s36, %s52
      %p54 = scmp.eq.s32.totalorder %s28, 0
      %p55 = por %p53, %p54
      %s57 = sadd.s32 %s56, 1
      %p60 = scmp.eq.s32.totalorder %s22, 1
      %p61 = scmp.ne.s32.totalorder %s56, %s58
      %p62 = scmp.eq.s32.totalorder %s22, 0
      %p63 = por %p61, %p62
      %p64 = scmp.ne.s32.totalorder %s56, %s58
      %p65 = scmp.eq.s32.totalorder %s27, 1
      %p66 = por %p64, %p65
      %p67 = scmp.ne.s32.totalorder %s58, %s59
      %p68 = scmp.eq.s32.totalorder %s27, 0
      %p69 = por %p67, %p68
      %p70 = scmp.ne.s32.totalorder %s58, %s59
      %p71 = scmp.eq.s32.totalorder %s28, 1
      %p72 = por %p70, %p71
      %p74 = scmp.ne.s32.totalorder %s59, %s73
      %p75 = scmp.eq.s32.totalorder %s28, 0
      %p76 = por %p74, %p75
      %s78 = sadd.s32 %s77, 1
      %p81 = scmp.eq.s32.totalorder %s22, 1
      %p82 = scmp.ne.s32.totalorder %s77, %s79
      %p83 = scmp.eq.s32.totalorder %s22, 0
      %p84 = por %p82, %p83
      %p85 = scmp.ne.s32.totalorder %s77, %s79
      %p86 = scmp.eq.s32.totalorder %s27, 1
      %p87 = por %p85, %p86
      %p88 = scmp.ne.s32.totalorder %s79, %s80
      %p89 = scmp.eq.s32.totalorder %s27, 0
      %p90 = por %p88, %p89
      %p91 = scmp.ne.s32.totalorder %s79, %s80
      %p92 = scmp.eq.s32.totalorder %s28, 1
      %p93 = por %p91, %p92
      %p95 = scmp.ne.s32.totalorder %s80, %s94
      %p96 = scmp.eq.s32.totalorder %s28, 0
      %p97 = por %p95, %p96
      %s99 = sadd.s32 %s98, 1
      %p102 = scmp.eq.s32.totalorder %s22, 1
      %p103 = scmp.ne.s32.totalorder %s98, %s100
      %p104 = scmp.eq.s32.totalorder %s22, 0
      %p105 = por %p103, %p104
      %p106 = scmp.ne.s32.totalorder %s98, %s100
      %p107 = scmp.eq.s32.totalorder %s27, 1
      %p108 = por %p106, %p107
      %p109 = scmp.ne.s32.totalorder %s100, %s101
      %p110 = scmp.eq.s32.totalorder %s27, 0
      %p111 = por %p109, %p110
      %p112 = scmp.ne.s32.totalorder %s100, %s101
      %p113 = scmp.eq.s32.totalorder %s28, 1
      %p114 = por %p112, %p113
      %p116 = scmp.ne.s32.totalorder %s101, %s115
      %p117 = scmp.eq.s32.totalorder %s28, 0
      %p118 = por %p116, %p117
      %s120 = sadd.s32 %s119, 1
      %p123 = scmp.eq.s32.totalorder %s22, 1
      %p124 = scmp.ne.s32.totalorder %s119, %s121
      %p125 = scmp.eq.s32.totalorder %s22, 0
      %p126 = por %p124, %p125
      %p127 = scmp.ne.s32.totalorder %s119, %s121
      %p128 = scmp.eq.s32.totalorder %s27, 1
      %p129 = por %p127, %p128
      %p130 = scmp.ne.s32.totalorder %s121, %s122
      %p131 = scmp.eq.s32.totalorder %s27, 0
      %p132 = por %p130, %p131
      %p133 = scmp.ne.s32.totalorder %s121, %s122
      %p134 = scmp.eq.s32.totalorder %s28, 1
      %p135 = por %p133, %p134
      %p137 = scmp.ne.s32.totalorder %s122, %s136
      %p138 = scmp.eq.s32.totalorder %s28, 0
      %p139 = por %p137, %p138
      %s141 = sadd.s32 %s140, 1
      %p144 = scmp.eq.s32.totalorder %s22, 1
      %p145 = scmp.ne.s32.totalorder %s140, %s142
      %p146 = scmp.eq.s32.totalorder %s22, 0
      %p147 = por %p145, %p146
      %p148 = scmp.ne.s32.totalorder %s140, %s142
      %p149 = scmp.eq.s32.totalorder %s27, 1
      %p150 = por %p148, %p149
      %p151 = scmp.ne.s32.totalorder %s142, %s143
      %p152 = scmp.eq.s32.totalorder %s27, 0
      %p153 = por %p151, %p152
      %p154 = scmp.ne.s32.totalorder %s142, %s143
      %p155 = scmp.eq.s32.totalorder %s28, 1
      %p156 = por %p154, %p155
      %p158 = scmp.ne.s32.totalorder %s143, %s157
      %p159 = scmp.eq.s32.totalorder %s28, 0
      %p160 = por %p158, %p159
      %s162 = sadd.s32 %s161, 1
      %p165 = scmp.eq.s32.totalorder %s22, 1
      %p166 = scmp.ne.s32.totalorder %s161, %s163
      %p167 = scmp.eq.s32.totalorder %s22, 0
      %p168 = por %p166, %p167
      %p169 = scmp.ne.s32.totalorder %s161, %s163
      %p170 = scmp.eq.s32.totalorder %s27, 1
      %p171 = por %p169, %p170
      %p172 = scmp.ne.s32.totalorder %s163, %s164
      %p173 = scmp.eq.s32.totalorder %s27, 0
      %p174 = por %p172, %p173
      %p175 = scmp.ne.s32.totalorder %s163, %s164
      %p176 = scmp.eq.s32.totalorder %s28, 1
      %p177 = por %p175, %p176
      %p179 = scmp.ne.s32.totalorder %s164, %s178
      %p180 = scmp.eq.s32.totalorder %s28, 0
      %p181 = por %p179, %p180
      %s182 = ssub.s32 %s22, %s29
      %p183 = scmp.eq.s32.totalorder %s182, 0
      %s185 = sadd.s32 %s184, 1
      %s186 = scalar_select %p183, %s184, %s185
      %p189 = pneg %p183
      %p190 = scmp.eq.s32.totalorder %s22, 1
      %p191 = por %p189, %p190
      %p192 = scmp.ne.s32.totalorder %s184, %s187
      %p193 = scmp.eq.s32.totalorder %s22, 0
      %p194 = por %p192, %p193
      %p195 = scmp.ne.s32.totalorder %s184, %s187
      %p196 = scmp.eq.s32.totalorder %s27, 1
      %p197 = por %p195, %p196
      %p198 = scmp.ne.s32.totalorder %s187, %s188
      %p199 = scmp.eq.s32.totalorder %s27, 0
      %p200 = por %p198, %p199
      %p201 = scmp.ne.s32.totalorder %s187, %s188
      %p202 = scmp.eq.s32.totalorder %s28, 1
      %p203 = por %p201, %p202
      %p205 = scmp.ne.s32.totalorder %s188, %s204
      %p206 = scmp.eq.s32.totalorder %s28, 0
      %p207 = por %p205, %p206
      %p208 = scmp.le.s32.totalorder 1, %s22
      %p209 = scmp.lt.s32.totalorder %s22, 3
      %p210 = pnand %p208, %p209
      %p211 = pneg %p210
      // Predicated region
      $region9: #{tpu_custom_call.1} parent=5 // pred_check
        _
      $region10: #{tpu_custom_call.1} parent=5 // pred_check_branch
        %213 = sbr.rel (%p210) target = $region12
      $region11: #{tpu_custom_call.1} parent=5 // pred_region
        %s214 = ssub.s32 %s22, 1
        // Predicated region
        $region13: #{tpu_custom_call.1} parent=11 // pred_check
          %p215 = pneg %p69
        $region14: #{tpu_custom_call.1} parent=11 // pred_check_branch
          %217 = sbr.rel (%p215) target = $region16
        $region15: #{tpu_custom_call.1} parent=11 // pred_region
          _
        $region16: #{tpu_custom_call.1} parent=11 // pred_fallthru
          _
        // Predicated region
        $region17: #{tpu_custom_call.1} parent=11 // pred_check
          %p218 = pneg %p90
        $region18: #{tpu_custom_call.1} parent=11 // pred_check_branch
          %220 = sbr.rel (%p218) target = $region20
        $region19: #{tpu_custom_call.1} parent=11 // pred_region
          %s222 = ssub.s32 512, 512
          %223 = vsyncadd [#allocation6], %s222
          %s224 = sshll.u32 [#allocation5], 4
          %s225 = int_to_ptr.vmem [resolvable:$true] %s224
          %230 = dma.hbm_to_vmem [thread:$0]  %s2, 512, %s225, [#allocation6], 128, 128, 8
        $region20: #{tpu_custom_call.1} parent=11 // pred_fallthru
          _
        // Predicated region
        $region21: #{tpu_custom_call.1} parent=11 // pred_check
          %p231 = pneg %p111
        $region22: #{tpu_custom_call.1} parent=11 // pred_check_branch
          %233 = sbr.rel (%p231) target = $region24
        $region23: #{tpu_custom_call.1} parent=11 // pred_region
          %s235 = ssub.s32 16, 16
          %236 = vsyncadd [#allocation6], %s235
          %s238 = sshll.u32 [#allocation7], 4
          %s239 = int_to_ptr.vmem [resolvable:$true] %s238
          %241 = dma.hbm_to_vmem [thread:$0]  %s3, 16, %s239, [#allocation6]
        $region24: #{tpu_custom_call.1} parent=11 // pred_fallthru
          _
        // Predicated region
        $region25: #{tpu_custom_call.1} parent=11 // pred_check
          %p242 = pneg %p132
        $region26: #{tpu_custom_call.1} parent=11 // pred_check_branch
          %244 = sbr.rel (%p242) target = $region28
        $region27: #{tpu_custom_call.1} parent=11 // pred_region
          %s246 = ssub.s32 16, 16
          %247 = vsyncadd [#allocation9], %s246
          %s249 = sshll.u32 [#allocation8], 4
          %s250 = int_to_ptr.vmem [resolvable:$true] %s249
          %252 = dma.hbm_to_vmem [thread:$0]  %s4, 16, %s250, [#allocation9]
        $region28: #{tpu_custom_call.1} parent=11 // pred_fallthru
          _
        // Predicated region
        $region29: #{tpu_custom_call.1} parent=11 // pred_check
          %p253 = pneg %p153
        $region30: #{tpu_custom_call.1} parent=11 // pred_check_branch
          %255 = sbr.rel (%p253) target = $region32
        $region31: #{tpu_custom_call.1} parent=11 // pred_region
          %s257 = ssub.s32 3072, 3072
          %258 = vsyncadd [#allocation9], %s257
          %s259 = sshll.u32 [#allocation10], 4
          %s260 = int_to_ptr.vmem [resolvable:$true] %s259
          %265 = dma.hbm_to_vmem [thread:$0]  %s5, 3072, %s260, [#allocation9], 192, 192, 12
        $region32: #{tpu_custom_call.1} parent=11 // pred_fallthru
          _
        // Predicated region
        $region33: #{tpu_custom_call.1} parent=11 // pred_check
          %p266 = pneg %p174
        $region34: #{tpu_custom_call.1} parent=11 // pred_check_branch
          %268 = sbr.rel (%p266) target = $region36
        $region35: #{tpu_custom_call.1} parent=11 // pred_region
          %s270 = ssub.s32 48, 48
          %271 = vsyncadd [#allocation12], %s270
          %s273 = sshll.u32 [#allocation11], 4
          %s274 = int_to_ptr.vmem [resolvable:$true] %s273
          %276 = dma.hbm_to_vmem [thread:$0]  %s6, 48, %s274, [#allocation12]
        $region36: #{tpu_custom_call.1} parent=11 // pred_fallthru
          _
      $region12: #{tpu_custom_call.1} parent=5 // pred_fallthru
        _
      %p277 = scmp.lt.s32.totalorder %s22, 2
      // Predicated region
      $region37: #{tpu_custom_call.1} parent=5 // pred_check
        %p278 = pneg %p277
      $region38: #{tpu_custom_call.1} parent=5 // pred_check_branch
        %280 = sbr.rel (%p278) target = $region40
      $region39: #{tpu_custom_call.1} parent=5 // pred_region
        // Predicated region
        $region41: #{tpu_custom_call.1} parent=39 // pred_check
          %p281 = pneg %p42
        $region42: #{tpu_custom_call.1} parent=39 // pred_check_branch
          %283 = sbr.rel (%p281) target = $region44
        $region43: #{tpu_custom_call.1} parent=39 // pred_region
          %s284 = sand.u32 %s32, 1
          %s285 = scalar_lea.sflag [#allocation3], %s284
          %s286 = sand.u32 %s32, 1
          %s287 = smul.addr %s286, 1024
          %s288 = scalar_lea.vmem [#allocation2], %s287
          %s290 = ssub.s32 16384, 16384
          %291 = vsyncadd %s285, %s290
          %s292 = smul.addr %s22, 128
          %s293 = smul.addr %s292, 128
          %s294 = scalar_lea.hbm %s0, %s293
          %s295 = sshll.u32 %s288, 4
          %s296 = int_to_ptr.vmem [resolvable:$true] %s295
          %301 = dma.hbm_to_vmem [thread:$0]  %s294, 16384, %s296, %s285, 128, 128, 8
        $region44: #{tpu_custom_call.1} parent=39 // pred_fallthru
          _
      $region40: #{tpu_custom_call.1} parent=5 // pred_fallthru
        _
      %p302 = scmp.le.s32.totalorder 1, %s22
      %p303 = scmp.lt.s32.totalorder %s22, 3
      %p304 = pnand %p302, %p303
      %p305 = pneg %p304
      // Predicated region
      $region45: #{tpu_custom_call.1} parent=5 // pred_check
        _
      $region46: #{tpu_custom_call.1} parent=5 // pred_check_branch
        %307 = sbr.rel (%p304) target = $region48
      $region47: #{tpu_custom_call.1} parent=5 // pred_region
        %s308 = ssub.s32 %s22, 1
        %s309 = sand.u32 %s35, 1
        %s310 = scalar_lea.sflag [#allocation3], %s309
        %s311 = sand.u32 %s35, 1
        %s312 = smul.addr %s311, 1024
        %s313 = scalar_lea.vmem [#allocation2], %s312
        // Predicated region
        $region49: #{tpu_custom_call.1} parent=47 // pred_check
          %p314 = pneg %p48
        $region50: #{tpu_custom_call.1} parent=47 // pred_check_branch
          %316 = sbr.rel (%p314) target = $region52
        $region51: #{tpu_custom_call.1} parent=47 // pred_region
          %317 = dma.done %s310, 16384
        $region52: #{tpu_custom_call.1} parent=47 // pred_fallthru
          _
        // Predicated region
        $region53: #{tpu_custom_call.1} parent=47 // pred_check
          %p318 = pneg %p90
        $region54: #{tpu_custom_call.1} parent=47 // pred_check_branch
          %320 = sbr.rel (%p318) target = $region56
        $region55: #{tpu_custom_call.1} parent=47 // pred_region
          %321 = dma.done [#allocation6], 512
        $region56: #{tpu_custom_call.1} parent=47 // pred_fallthru
          _
        // Predicated region
        $region57: #{tpu_custom_call.1} parent=47 // pred_check
          %p322 = pneg %p111
        $region58: #{tpu_custom_call.1} parent=47 // pred_check_branch
          %324 = sbr.rel (%p322) target = $region60
        $region59: #{tpu_custom_call.1} parent=47 // pred_region
          %325 = dma.done [#allocation6], 16
        $region60: #{tpu_custom_call.1} parent=47 // pred_fallthru
          _
        // Predicated region
        $region61: #{tpu_custom_call.1} parent=47 // pred_check
          %p326 = pneg %p132
        $region62: #{tpu_custom_call.1} parent=47 // pred_check_branch
          %328 = sbr.rel (%p326) target = $region64
        $region63: #{tpu_custom_call.1} parent=47 // pred_region
          %329 = dma.done [#allocation9], 16
        $region64: #{tpu_custom_call.1} parent=47 // pred_fallthru
          _
        // Predicated region
        $region65: #{tpu_custom_call.1} parent=47 // pred_check
          %p330 = pneg %p153
        $region66: #{tpu_custom_call.1} parent=47 // pred_check_branch
          %332 = sbr.rel (%p330) target = $region68
        $region67: #{tpu_custom_call.1} parent=47 // pred_region
          %333 = dma.done [#allocation9], 3072
        $region68: #{tpu_custom_call.1} parent=47 // pred_fallthru
          _
        // Predicated region
        $region69: #{tpu_custom_call.1} parent=47 // pred_check
          %p334 = pneg %p174
        $region70: #{tpu_custom_call.1} parent=47 // pred_check_branch
          %336 = sbr.rel (%p334) target = $region72
        $region71: #{tpu_custom_call.1} parent=47 // pred_region
          %337 = dma.done [#allocation12], 48
        $region72: #{tpu_custom_call.1} parent=47 // pred_fallthru
          _
        %s338 = sand.u32 %s35, 1
        %s339 = scalar_lea.sflag [#allocation3], %s338
        %s340 = sand.u32 %s35, 1
        %s341 = smul.addr %s340, 1024
        %s342 = scalar_lea.vmem [#allocation2], %s341
        %p343 = pneg %p48
        %p344 = pneg %p45
        %p345 = pneg %p69
        %p346 = pneg %p66
        %p347 = pneg %p90
        %p348 = pneg %p87
        %p349 = pneg %p111
        %p350 = pneg %p108
        %p351 = pneg %p132
        %p352 = pneg %p129
        %p353 = pneg %p153
        %p354 = pneg %p150
        %p355 = pneg %p174
        %p356 = pneg %p171
        %p357 = pneg %p200
        %p358 = pneg %p197
        %s359 = sand.u32 %s187, 1
        %s360 = scalar_lea.sflag [#allocation4], %s359
        %s361 = sand.u32 %s187, 1
        %s362 = smul.addr %s361, 1536
        %s363 = scalar_lea.vmem [#allocation13], %s362
        loop: start=0, step=1, limit=2
        $region73: #{tpu_custom_call.1} parent=47 // loop_pre_header
          _
        $region74: #{tpu_custom_call.1} parent=47 // loop_header
          %s366 = sphi 0, %s370
          %p367 = scmp.ge.s32.totalorder %s366, 2
          %v371 = vphi 0.0, %v508
          %v372 = vphi 0.0, %v642
        $region75: #{tpu_custom_call.1} parent=47 // loop_header_branch
          %369 = sbr.rel (%p367) target = $region79
        $region76: #{tpu_custom_call.1} parent=47 // loop_body
          %s373 = smul.u32 %s366, 512
          %s374 = scalar_lea.vmem %s313, %s373 [#allocation2]
          %v375 = vld [vmem:[%s374] sm:$0xff]
          %v376 = vld [vmem:[%s374 + $0x8] sm:$0xff]
          %v377 = vld [vmem:[%s374 + $0x10] sm:$0xff]
          %v378 = vld [vmem:[%s374 + $0x18] sm:$0xff]
          %v379 = vld [vmem:[%s374 + $0x20] sm:$0xff]
          %v380 = vld [vmem:[%s374 + $0x28] sm:$0xff]
          %v381 = vld [vmem:[%s374 + $0x30] sm:$0xff]
          %v382 = vld [vmem:[%s374 + $0x38] sm:$0xff]
          %v383 = vld [vmem:[%s374 + $0x40] sm:$0xff]
          %v384 = vld [vmem:[%s374 + $0x48] sm:$0xff]
          %v385 = vld [vmem:[%s374 + $0x50] sm:$0xff]
          %v386 = vld [vmem:[%s374 + $0x58] sm:$0xff]
          %v387 = vld [vmem:[%s374 + $0x60] sm:$0xff]
          %v388 = vld [vmem:[%s374 + $0x68] sm:$0xff]
          %v389 = vld [vmem:[%s374 + $0x70] sm:$0xff]
          %v390 = vld [vmem:[%s374 + $0x78] sm:$0xff]
          %v391 = vld [vmem:[%s374 + $0x80] sm:$0xff]
          %v392 = vld [vmem:[%s374 + $0x88] sm:$0xff]
          %v393 = vld [vmem:[%s374 + $0x90] sm:$0xff]
          %v394 = vld [vmem:[%s374 + $0x98] sm:$0xff]
          %v395 = vld [vmem:[%s374 + $0xa0] sm:$0xff]
          %v396 = vld [vmem:[%s374 + $0xa8] sm:$0xff]
          %v397 = vld [vmem:[%s374 + $0xb0] sm:$0xff]
          %v398 = vld [vmem:[%s374 + $0xb8] sm:$0xff]
          %v399 = vld [vmem:[%s374 + $0xc0] sm:$0xff]
          %v400 = vld [vmem:[%s374 + $0xc8] sm:$0xff]
          %v401 = vld [vmem:[%s374 + $0xd0] sm:$0xff]
          %v402 = vld [vmem:[%s374 + $0xd8] sm:$0xff]
          %v403 = vld [vmem:[%s374 + $0xe0] sm:$0xff]
          %v404 = vld [vmem:[%s374 + $0xe8] sm:$0xff]
          %v405 = vld [vmem:[%s374 + $0xf0] sm:$0xff]
          %v406 = vld [vmem:[%s374 + $0xf8] sm:$0xff]
          %v407 = vld [vmem:[%s374 + $0x100] sm:$0xff]
          %v408 = vld [vmem:[%s374 + $0x108] sm:$0xff]
          %v409 = vld [vmem:[%s374 + $0x110] sm:$0xff]
          %v410 = vld [vmem:[%s374 + $0x118] sm:$0xff]
          %v411 = vld [vmem:[%s374 + $0x120] sm:$0xff]
          %v412 = vld [vmem:[%s374 + $0x128] sm:$0xff]
          %v413 = vld [vmem:[%s374 + $0x130] sm:$0xff]
          %v414 = vld [vmem:[%s374 + $0x138] sm:$0xff]
          %v415 = vld [vmem:[%s374 + $0x140] sm:$0xff]
          %v416 = vld [vmem:[%s374 + $0x148] sm:$0xff]
          %v417 = vld [vmem:[%s374 + $0x150] sm:$0xff]
          %v418 = vld [vmem:[%s374 + $0x158] sm:$0xff]
          %v419 = vld [vmem:[%s374 + $0x160] sm:$0xff]
          %v420 = vld [vmem:[%s374 + $0x168] sm:$0xff]
          %v421 = vld [vmem:[%s374 + $0x170] sm:$0xff]
          %v422 = vld [vmem:[%s374 + $0x178] sm:$0xff]
          %v423 = vld [vmem:[%s374 + $0x180] sm:$0xff]
          %v424 = vld [vmem:[%s374 + $0x188] sm:$0xff]
          %v425 = vld [vmem:[%s374 + $0x190] sm:$0xff]
          %v426 = vld [vmem:[%s374 + $0x198] sm:$0xff]
          %v427 = vld [vmem:[%s374 + $0x1a0] sm:$0xff]
          %v428 = vld [vmem:[%s374 + $0x1a8] sm:$0xff]
          %v429 = vld [vmem:[%s374 + $0x1b0] sm:$0xff]
          %v430 = vld [vmem:[%s374 + $0x1b8] sm:$0xff]
          %v431 = vld [vmem:[%s374 + $0x1c0] sm:$0xff]
          %v432 = vld [vmem:[%s374 + $0x1c8] sm:$0xff]
          %v433 = vld [vmem:[%s374 + $0x1d0] sm:$0xff]
          %v434 = vld [vmem:[%s374 + $0x1d8] sm:$0xff]
          %v435 = vld [vmem:[%s374 + $0x1e0] sm:$0xff]
          %v436 = vld [vmem:[%s374 + $0x1e8] sm:$0xff]
          %v437 = vld [vmem:[%s374 + $0x1f0] sm:$0xff]
          %v438 = vld [vmem:[%s374 + $0x1f8] sm:$0xff]
          %v439 = vadd.f32 %v375, %v376
          %v440 = vadd.f32 %v439, %v377
          %v441 = vadd.f32 %v440, %v378
          %v442 = vadd.f32 %v441, %v379
          %v443 = vadd.f32 %v442, %v380
          %v444 = vadd.f32 %v443, %v381
          %v445 = vadd.f32 %v444, %v382
          %v446 = vadd.f32 %v445, %v383
          %v447 = vadd.f32 %v446, %v384
          %v448 = vadd.f32 %v447, %v385
          %v449 = vadd.f32 %v448, %v386
          %v450 = vadd.f32 %v449, %v387
          %v451 = vadd.f32 %v450, %v388
          %v452 = vadd.f32 %v451, %v389
          %v453 = vadd.f32 %v452, %v390
          %v454 = vadd.f32 %v453, %v391
          %v455 = vadd.f32 %v454, %v392
          %v456 = vadd.f32 %v455, %v393
          %v457 = vadd.f32 %v456, %v394
          %v458 = vadd.f32 %v457, %v395
          %v459 = vadd.f32 %v458, %v396
          %v460 = vadd.f32 %v459, %v397
          %v461 = vadd.f32 %v460, %v398
          %v462 = vadd.f32 %v461, %v399
          %v463 = vadd.f32 %v462, %v400
          %v464 = vadd.f32 %v463, %v401
          %v465 = vadd.f32 %v464, %v402
          %v466 = vadd.f32 %v465, %v403
          %v467 = vadd.f32 %v466, %v404
          %v468 = vadd.f32 %v467, %v405
          %v469 = vadd.f32 %v468, %v406
          %v470 = vadd.f32 %v469, %v407
          %v471 = vadd.f32 %v470, %v408
          %v472 = vadd.f32 %v471, %v409
          %v473 = vadd.f32 %v472, %v410
          %v474 = vadd.f32 %v473, %v411
          %v475 = vadd.f32 %v474, %v412
          %v476 = vadd.f32 %v475, %v413
          %v477 = vadd.f32 %v476, %v414
          %v478 = vadd.f32 %v477, %v415
          %v479 = vadd.f32 %v478, %v416
          %v480 = vadd.f32 %v479, %v417
          %v481 = vadd.f32 %v480, %v418
          %v482 = vadd.f32 %v481, %v419
          %v483 = vadd.f32 %v482, %v420
          %v484 = vadd.f32 %v483, %v421
          %v485 = vadd.f32 %v484, %v422
          %v486 = vadd.f32 %v485, %v423
          %v487 = vadd.f32 %v486, %v424
          %v488 = vadd.f32 %v487, %v425
          %v489 = vadd.f32 %v488, %v426
          %v490 = vadd.f32 %v489, %v427
          %v491 = vadd.f32 %v490, %v428
          %v492 = vadd.f32 %v491, %v429
          %v493 = vadd.f32 %v492, %v430
          %v494 = vadd.f32 %v493, %v431
          %v495 = vadd.f32 %v494, %v432
          %v496 = vadd.f32 %v495, %v433
          %v497 = vadd.f32 %v496, %v434
          %v498 = vadd.f32 %v497, %v435
          %v499 = vadd.f32 %v498, %v436
          %v500 = vadd.f32 %v499, %v437
          %v501 = vadd.f32 %v500, %v438
          %v502 = vrot.slane %v501, 4
          %v503 = vadd.f32 %v501, %v502
          %v504 = vrot.slane %v503, 2
          %v505 = vadd.f32 %v503, %v504
          %v506 = vrot.slane %v505, 1
          %v507 = vadd.f32 %v505, %v506
          %v508 = vadd.f32 %v371, %v507
          %v509 = vmul.f32 %v375, %v375
          %v510 = vmul.f32 %v376, %v376
          %v511 = vmul.f32 %v377, %v377
          %v512 = vmul.f32 %v378, %v378
          %v513 = vmul.f32 %v379, %v379
          %v514 = vmul.f32 %v380, %v380
          %v515 = vmul.f32 %v381, %v381
          %v516 = vmul.f32 %v382, %v382
          %v517 = vmul.f32 %v383, %v383
          %v518 = vmul.f32 %v384, %v384
          %v519 = vmul.f32 %v385, %v385
          %v520 = vmul.f32 %v386, %v386
          %v521 = vmul.f32 %v387, %v387
          %v522 = vmul.f32 %v388, %v388
          %v523 = vmul.f32 %v389, %v389
          %v524 = vmul.f32 %v390, %v390
          %v525 = vmul.f32 %v391, %v391
          %v526 = vmul.f32 %v392, %v392
          %v527 = vmul.f32 %v393, %v393
          %v528 = vmul.f32 %v394, %v394
          %v529 = vmul.f32 %v395, %v395
          %v530 = vmul.f32 %v396, %v396
          %v531 = vmul.f32 %v397, %v397
          %v532 = vmul.f32 %v398, %v398
          %v533 = vmul.f32 %v399, %v399
          %v534 = vmul.f32 %v400, %v400
          %v535 = vmul.f32 %v401, %v401
          %v536 = vmul.f32 %v402, %v402
          %v537 = vmul.f32 %v403, %v403
          %v538 = vmul.f32 %v404, %v404
          %v539 = vmul.f32 %v405, %v405
          %v540 = vmul.f32 %v406, %v406
          %v541 = vmul.f32 %v407, %v407
          %v542 = vmul.f32 %v408, %v408
          %v543 = vmul.f32 %v409, %v409
          %v544 = vmul.f32 %v410, %v410
          %v545 = vmul.f32 %v411, %v411
          %v546 = vmul.f32 %v412, %v412
          %v547 = vmul.f32 %v413, %v413
          %v548 = vmul.f32 %v414, %v414
          %v549 = vmul.f32 %v415, %v415
          %v550 = vmul.f32 %v416, %v416
          %v551 = vmul.f32 %v417, %v417
          %v552 = vmul.f32 %v418, %v418
          %v553 = vmul.f32 %v419, %v419
          %v554 = vmul.f32 %v420, %v420
          %v555 = vmul.f32 %v421, %v421
          %v556 = vmul.f32 %v422, %v422
          %v557 = vmul.f32 %v423, %v423
          %v558 = vmul.f32 %v424, %v424
          %v559 = vmul.f32 %v425, %v425
          %v560 = vmul.f32 %v426, %v426
          %v561 = vmul.f32 %v427, %v427
          %v562 = vmul.f32 %v428, %v428
          %v563 = vmul.f32 %v429, %v429
          %v564 = vmul.f32 %v430, %v430
          %v565 = vmul.f32 %v431, %v431
          %v566 = vmul.f32 %v432, %v432
          %v567 = vmul.f32 %v433, %v433
          %v568 = vmul.f32 %v434, %v434
          %v569 = vmul.f32 %v435, %v435
          %v570 = vmul.f32 %v436, %v436
          %v571 = vmul.f32 %v437, %v437
          %v572 = vmul.f32 %v438, %v438
          %v573 = vadd.f32 %v509, %v510
          %v574 = vadd.f32 %v573, %v511
          %v575 = vadd.f32 %v574, %v512
          %v576 = vadd.f32 %v575, %v513
          %v577 = vadd.f32 %v576, %v514
          %v578 = vadd.f32 %v577, %v515
          %v579 = vadd.f32 %v578, %v516
          %v580 = vadd.f32 %v579, %v517
          %v581 = vadd.f32 %v580, %v518
          %v582 = vadd.f32 %v581, %v519
          %v583 = vadd.f32 %v582, %v520
          %v584 = vadd.f32 %v583, %v521
          %v585 = vadd.f32 %v584, %v522
          %v586 = vadd.f32 %v585, %v523
          %v587 = vadd.f32 %v586, %v524
          %v588 = vadd.f32 %v587, %v525
          %v589 = vadd.f32 %v588, %v526
          %v590 = vadd.f32 %v589, %v527
          %v591 = vadd.f32 %v590, %v528
          %v592 = vadd.f32 %v591, %v529
          %v593 = vadd.f32 %v592, %v530
          %v594 = vadd.f32 %v593, %v531
          %v595 = vadd.f32 %v594, %v532
          %v596 = vadd.f32 %v595, %v533
          %v597 = vadd.f32 %v596, %v534
          %v598 = vadd.f32 %v597, %v535
          %v599 = vadd.f32 %v598, %v536
          %v600 = vadd.f32 %v599, %v537
          %v601 = vadd.f32 %v600, %v538
          %v602 = vadd.f32 %v601, %v539
          %v603 = vadd.f32 %v602, %v540
          %v604 = vadd.f32 %v603, %v541
          %v605 = vadd.f32 %v604, %v542
          %v606 = vadd.f32 %v605, %v543
          %v607 = vadd.f32 %v606, %v544
          %v608 = vadd.f32 %v607, %v545
          %v609 = vadd.f32 %v608, %v546
          %v610 = vadd.f32 %v609, %v547
          %v611 = vadd.f32 %v610, %v548
          %v612 = vadd.f32 %v611, %v549
          %v613 = vadd.f32 %v612, %v550
          %v614 = vadd.f32 %v613, %v551
          %v615 = vadd.f32 %v614, %v552
          %v616 = vadd.f32 %v615, %v553
          %v617 = vadd.f32 %v616, %v554
          %v618 = vadd.f32 %v617, %v555
          %v619 = vadd.f32 %v618, %v556
          %v620 = vadd.f32 %v619, %v557
          %v621 = vadd.f32 %v620, %v558
          %v622 = vadd.f32 %v621, %v559
          %v623 = vadd.f32 %v622, %v560
          %v624 = vadd.f32 %v623, %v561
          %v625 = vadd.f32 %v624, %v562
          %v626 = vadd.f32 %v625, %v563
          %v627 = vadd.f32 %v626, %v564
          %v628 = vadd.f32 %v627, %v565
          %v629 = vadd.f32 %v628, %v566
          %v630 = vadd.f32 %v629, %v567
          %v631 = vadd.f32 %v630, %v568
          %v632 = vadd.f32 %v631, %v569
          %v633 = vadd.f32 %v632, %v570
          %v634 = vadd.f32 %v633, %v571
          %v635 = vadd.f32 %v634, %v572
          %v636 = vrot.slane %v635, 4
          %v637 = vadd.f32 %v635, %v636
          %v638 = vrot.slane %v637, 2
          %v639 = vadd.f32 %v637, %v638
          %v640 = vrot.slane %v639, 1
          %v641 = vadd.f32 %v639, %v640
          %v642 = vadd.f32 %v372, %v641
        $region77: #{tpu_custom_call.1} parent=47 // loop_footer
          %s370 = sadd.s32 1, %s366
        $region78: #{tpu_custom_call.1} parent=47 // loop_footer_branch
          %365 = sbr.rel target = $region74
        $region79: #{tpu_custom_call.1} parent=47 // loop_exit
          _
        %v643 = vld [vmem:[%s1] sm:$0xff]
        %v644 = vld [vmem:[%s1 + $0x8] sm:$0xff]
        %v645 = vld [vmem:[%s1 + $0x10] sm:$0xff]
        %v646 = vld [vmem:[%s1 + $0x18] sm:$0xff]
        %v647 = vld [vmem:[%s1 + $0x20] sm:$0xff]
        %v648 = vld [vmem:[%s1 + $0x28] sm:$0xff]
        %v649 = vld [vmem:[%s1 + $0x30] sm:$0xff]
        %v650 = vld [vmem:[%s1 + $0x38] sm:$0xff]
        %v651 = vld [vmem:[%s1 + $0x40] sm:$0xff]
        %v652 = vld [vmem:[%s1 + $0x48] sm:$0xff]
        %v653 = vld [vmem:[%s1 + $0x50] sm:$0xff]
        %v654 = vld [vmem:[%s1 + $0x58] sm:$0xff]
        %v655 = vld [vmem:[%s1 + $0x60] sm:$0xff]
        %v656 = vld [vmem:[%s1 + $0x68] sm:$0xff]
        %v657 = vld [vmem:[%s1 + $0x70] sm:$0xff]
        %v658 = vld [vmem:[%s1 + $0x78] sm:$0xff]
        %659 = vmatprep.subr.mxu0 0.0
        %660 = vmatpush1.msra.mxu0 %v643
        %661 = vmatprep.subr.mxu0 0.0
        %662 = vmatpush1.msra.mxu0 %v644
        %663 = vmatprep.subr.mxu0 0.0
        %664 = vmatpush1.msra.mxu0 %v645
        %665 = vmatprep.subr.mxu0 0.0
        %666 = vmatpush1.msra.mxu0 %v646
        %667 = vmatprep.subr.mxu0 0.0
        %668 = vmatpush1.msra.mxu0 %v647
        %669 = vmatprep.subr.mxu0 0.0
        %670 = vmatpush1.msra.mxu0 %v648
        %671 = vmatprep.subr.mxu0 0.0
        %672 = vmatpush1.msra.mxu0 %v649
        %673 = vmatprep.subr.mxu0 0.0
        %674 = vmatpush1.msra.mxu0 %v650
        %675 = vmatprep.subr.mxu0 0.0
        %676 = vmatpush1.msra.mxu0 %v651
        %677 = vmatprep.subr.mxu0 0.0
        %678 = vmatpush1.msra.mxu0 %v652
        %679 = vmatprep.subr.mxu0 0.0
        %680 = vmatpush1.msra.mxu0 %v653
        %681 = vmatprep.subr.mxu0 0.0
        %682 = vmatpush1.msra.mxu0 %v654
        %683 = vmatprep.subr.mxu0 0.0
        %684 = vmatpush1.msra.mxu0 %v655
        %685 = vmatprep.subr.mxu0 0.0
        %686 = vmatpush1.msra.mxu0 %v656
        %687 = vmatprep.subr.mxu0 0.0
        %688 = vmatpush1.msra.mxu0 %v657
        %689 = vmatprep.subr.mxu0 0.0
        %690 = vmatpush1.msra.mxu0 %v658
        %691 = vmatprep.subr.mxu0 0.0
        %692 = vmatpush1.msra.mxu0 0.0
        %693 = vmatprep.subr.mxu0 0.0
        %694 = vmatpush1.msra.mxu0 0.0
        %695 = vmatprep.subr.mxu0 0.0
        %696 = vmatpush1.msra.mxu0 0.0
        %697 = vmatprep.subr.mxu0 0.0
        %698 = vmatpush1.msra.mxu0 0.0
        %699 = vmatprep.subr.mxu0 0.0
        %700 = vmatpush1.msra.mxu0 0.0
        %701 = vmatprep.subr.mxu0 0.0
        %702 = vmatpush1.msra.mxu0 0.0
        %703 = vmatprep.subr.mxu0 0.0
        %704 = vmatpush1.msra.mxu0 0.0
        %705 = vmatprep.subr.mxu0 0.0
        %706 = vmatpush1.msra.mxu0 0.0
        %707 = vmatprep.subr.mxu0 0.0
        %708 = vmatpush1.msra.mxu0 0.0
        %709 = vmatprep.subr.mxu0 0.0
        %710 = vmatpush1.msra.mxu0 0.0
        %711 = vmatprep.subr.mxu0 0.0
        %712 = vmatpush1.msra.mxu0 0.0
        %713 = vmatprep.subr.mxu0 0.0
        %714 = vmatpush1.msra.mxu0 0.0
        %715 = vmatprep.subr.mxu0 0.0
        %716 = vmatpush1.msra.mxu0 0.0
        %717 = vmatprep.subr.mxu0 0.0
        %718 = vmatpush1.msra.mxu0 0.0
        %719 = vmatprep.subr.mxu0 0.0
        %720 = vmatpush1.msra.mxu0 0.0
        %721 = vmatprep.subr.mxu0 0.0
        %722 = vmatpush1.msra.mxu0 0.0
        %723 = vmatprep.mubr.f32.mxu0 0.0
        %724 = vmatmul.mubr.f32.gmra.mrb[0].mxu0 %v371
        %v725 = vpop.f32.mrb[0].mxu0
        %v726 = vadd.f32 0.0, %v725
        %v727 = vpop.f32.mrb[0].mxu0
        %728 = vdwg.mxu0
        %729 = vmatprep.subr.mxu0 0.0
        %730 = vmatpush1.msra.mxu0 %v643
        %731 = vmatprep.subr.mxu0 0.0
        %732 = vmatpush1.msra.mxu0 %v644
        %733 = vmatprep.subr.mxu0 0.0
        %734 = vmatpush1.msra.mxu0 %v645
        %735 = vmatprep.subr.mxu0 0.0
        %736 = vmatpush1.msra.mxu0 %v646
        %737 = vmatprep.subr.mxu0 0.0
        %738 = vmatpush1.msra.mxu0 %v647
        %739 = vmatprep.subr.mxu0 0.0
        %740 = vmatpush1.msra.mxu0 %v648
        %741 = vmatprep.subr.mxu0 0.0
        %742 = vmatpush1.msra.mxu0 %v649
        %743 = vmatprep.subr.mxu0 0.0
        %744 = vmatpush1.msra.mxu0 %v650
        %745 = vmatprep.subr.mxu0 0.0
        %746 = vmatpush1.msra.mxu0 %v651
        %747 = vmatprep.subr.mxu0 0.0
        %748 = vmatpush1.msra.mxu0 %v652
        %749 = vmatprep.subr.mxu0 0.0
        %750 = vmatpush1.msra.mxu0 %v653
        %751 = vmatprep.subr.mxu0 0.0
        %752 = vmatpush1.msra.mxu0 %v654
        %753 = vmatprep.subr.mxu0 0.0
        %754 = vmatpush1.msra.mxu0 %v655
        %755 = vmatprep.subr.mxu0 0.0
        %756 = vmatpush1.msra.mxu0 %v656
        %757 = vmatprep.subr.mxu0 0.0
        %758 = vmatpush1.msra.mxu0 %v657
        %759 = vmatprep.subr.mxu0 0.0
        %760 = vmatpush1.msra.mxu0 %v658
        %761 = vmatprep.subr.mxu0 0.0
        %762 = vmatpush1.msra.mxu0 0.0
        %763 = vmatprep.subr.mxu0 0.0
        %764 = vmatpush1.msra.mxu0 0.0
        %765 = vmatprep.subr.mxu0 0.0
        %766 = vmatpush1.msra.mxu0 0.0
        %767 = vmatprep.subr.mxu0 0.0
        %768 = vmatpush1.msra.mxu0 0.0
        %769 = vmatprep.subr.mxu0 0.0
        %770 = vmatpush1.msra.mxu0 0.0
        %771 = vmatprep.subr.mxu0 0.0
        %772 = vmatpush1.msra.mxu0 0.0
        %773 = vmatprep.subr.mxu0 0.0
        %774 = vmatpush1.msra.mxu0 0.0
        %775 = vmatprep.subr.mxu0 0.0
        %776 = vmatpush1.msra.mxu0 0.0
        %777 = vmatprep.subr.mxu0 0.0
        %778 = vmatpush1.msra.mxu0 0.0
        %779 = vmatprep.subr.mxu0 0.0
        %780 = vmatpush1.msra.mxu0 0.0
        %781 = vmatprep.subr.mxu0 0.0
        %782 = vmatpush1.msra.mxu0 0.0
        %783 = vmatprep.subr.mxu0 0.0
        %784 = vmatpush1.msra.mxu0 0.0
        %785 = vmatprep.subr.mxu0 0.0
        %786 = vmatpush1.msra.mxu0 0.0
        %787 = vmatprep.subr.mxu0 0.0
        %788 = vmatpush1.msra.mxu0 0.0
        %789 = vmatprep.subr.mxu0 0.0
        %790 = vmatpush1.msra.mxu0 0.0
        %791 = vmatprep.subr.mxu0 0.0
        %792 = vmatpush1.msra.mxu0 0.0
        %793 = vmatprep.mubr.f32.mxu0 0.0
        %794 = vmatmul.mubr.f32.gmra.mrb[0].mxu0 %v372
        %v795 = vpop.f32.mrb[0].mxu0
        %v796 = vadd.f32 0.0, %v795
        %v797 = vpop.f32.mrb[0].mxu0
        %798 = vdwg.mxu0
        %v799 = vld [vmem:[#allocation5] sm:$0xff]
        %v800 = vld [vmem:[#allocation5 + $0x8] sm:$0xff]
        %v801 = vld [vmem:[#allocation5 + $0x10] sm:$0xff]
        %v802 = vld [vmem:[#allocation5 + $0x18] sm:$0xff]
        %vm803 = vcmask 261120
        %v805 = vsel %vm803, %v726, 0
        %807 = vmatprep.subr.mxu0 0.0
        %808 = vmatpush1.msra.mxu0 %v799
        %809 = vmatprep.subr.mxu0 0.0
        %810 = vmatpush1.msra.mxu0 %v800
        %811 = vmatprep.subr.mxu0 0.0
        %812 = vmatpush1.msra.mxu0 %v801
        %813 = vmatprep.subr.mxu0 0.0
        %814 = vmatpush1.msra.mxu0 %v802
        %815 = vmatprep.subr.mxu0 0.0
        %816 = vmatpush1.msra.mxu0 0.0
        %817 = vmatprep.subr.mxu0 0.0
        %818 = vmatpush1.msra.mxu0 0.0
        %819 = vmatprep.subr.mxu0 0.0
        %820 = vmatpush1.msra.mxu0 0.0
        %821 = vmatprep.subr.mxu0 0.0
        %822 = vmatpush1.msra.mxu0 0.0
        %823 = vmatprep.subr.mxu0 0.0
        %824 = vmatpush1.msra.mxu0 0.0
        %825 = vmatprep.subr.mxu0 0.0
        %826 = vmatpush1.msra.mxu0 0.0
        %827 = vmatprep.subr.mxu0 0.0
        %828 = vmatpush1.msra.mxu0 0.0
        %829 = vmatprep.subr.mxu0 0.0
        %830 = vmatpush1.msra.mxu0 0.0
        %831 = vmatprep.subr.mxu0 0.0
        %832 = vmatpush1.msra.mxu0 0.0
        %833 = vmatprep.subr.mxu0 0.0
        %834 = vmatpush1.msra.mxu0 0.0
        %835 = vmatprep.subr.mxu0 0.0
        %836 = vmatpush1.msra.mxu0 0.0
        %837 = vmatprep.subr.mxu0 0.0
        %838 = vmatpush1.msra.mxu0 0.0
        %839 = vmatprep.subr.mxu0 0.0
        %840 = vmatpush1.msra.mxu0 0.0
        %841 = vmatprep.subr.mxu0 0.0
        %842 = vmatpush1.msra.mxu0 0.0
        %843 = vmatprep.subr.mxu0 0.0
        %844 = vmatpush1.msra.mxu0 0.0
        %845 = vmatprep.subr.mxu0 0.0
        %846 = vmatpush1.msra.mxu0 0.0
        %847 = vmatprep.subr.mxu0 0.0
        %848 = vmatpush1.msra.mxu0 0.0
        %849 = vmatprep.subr.mxu0 0.0
        %850 = vmatpush1.msra.mxu0 0.0
        %851 = vmatprep.subr.mxu0 0.0
        %852 = vmatpush1.msra.mxu0 0.0
        %853 = vmatprep.subr.mxu0 0.0
        %854 = vmatpush1.msra.mxu0 0.0
        %855 = vmatprep.subr.mxu0 0.0
        %856 = vmatpush1.msra.mxu0 0.0
        %857 = vmatprep.subr.mxu0 0.0
        %858 = vmatpush1.msra.mxu0 0.0
        %859 = vmatprep.subr.mxu0 0.0
        %860 = vmatpush1.msra.mxu0 0.0
        %861 = vmatprep.subr.mxu0 0.0
        %862 = vmatpush1.msra.mxu0 0.0
        %863 = vmatprep.subr.mxu0 0.0
        %864 = vmatpush1.msra.mxu0 0.0
        %865 = vmatprep.subr.mxu0 0.0
        %866 = vmatpush1.msra.mxu0 0.0
        %867 = vmatprep.subr.mxu0 0.0
        %868 = vmatpush1.msra.mxu0 0.0
        %869 = vmatprep.subr.mxu0 0.0
        %870 = vmatpush1.msra.mxu0 0.0
        %871 = vmatprep.mubr.f32.mxu0 0.0
        %872 = vmatmul.mubr.f32.gmra.mrb[0].mxu0 %v805
        %v873 = vpop.f32.mrb[0].mxu0
        %v874 = vadd.f32 0.0, %v873
        %v875 = vpop.f32.mrb[0].mxu0
        %876 = vdwg.mxu0
        %v878 = vsel %vm803, %v796, 0
        %880 = vmatprep.subr.mxu0 0.0
        %881 = vmatpush1.msra.mxu0 %v799
        %882 = vmatprep.subr.mxu0 0.0
        %883 = vmatpush1.msra.mxu0 %v800
        %884 = vmatprep.subr.mxu0 0.0
        %885 = vmatpush1.msra.mxu0 %v801
        %886 = vmatprep.subr.mxu0 0.0
        %887 = vmatpush1.msra.mxu0 %v802
        %888 = vmatprep.subr.mxu0 0.0
        %889 = vmatpush1.msra.mxu0 0.0
        %890 = vmatprep.subr.mxu0 0.0
        %891 = vmatpush1.msra.mxu0 0.0
        %892 = vmatprep.subr.mxu0 0.0
        %893 = vmatpush1.msra.mxu0 0.0
        %894 = vmatprep.subr.mxu0 0.0
        %895 = vmatpush1.msra.mxu0 0.0
        %896 = vmatprep.subr.mxu0 0.0
        %897 = vmatpush1.msra.mxu0 0.0
        %898 = vmatprep.subr.mxu0 0.0
        %899 = vmatpush1.msra.mxu0 0.0
        %900 = vmatprep.subr.mxu0 0.0
        %901 = vmatpush1.msra.mxu0 0.0
        %902 = vmatprep.subr.mxu0 0.0
        %903 = vmatpush1.msra.mxu0 0.0
        %904 = vmatprep.subr.mxu0 0.0
        %905 = vmatpush1.msra.mxu0 0.0
        %906 = vmatprep.subr.mxu0 0.0
        %907 = vmatpush1.msra.mxu0 0.0
        %908 = vmatprep.subr.mxu0 0.0
        %909 = vmatpush1.msra.mxu0 0.0
        %910 = vmatprep.subr.mxu0 0.0
        %911 = vmatpush1.msra.mxu0 0.0
        %912 = vmatprep.subr.mxu0 0.0
        %913 = vmatpush1.msra.mxu0 0.0
        %914 = vmatprep.subr.mxu0 0.0
        %915 = vmatpush1.msra.mxu0 0.0
        %916 = vmatprep.subr.mxu0 0.0
        %917 = vmatpush1.msra.mxu0 0.0
        %918 = vmatprep.subr.mxu0 0.0
        %919 = vmatpush1.msra.mxu0 0.0
        %920 = vmatprep.subr.mxu0 0.0
        %921 = vmatpush1.msra.mxu0 0.0
        %922 = vmatprep.subr.mxu0 0.0
        %923 = vmatpush1.msra.mxu0 0.0
        %924 = vmatprep.subr.mxu0 0.0
        %925 = vmatpush1.msra.mxu0 0.0
        %926 = vmatprep.subr.mxu0 0.0
        %927 = vmatpush1.msra.mxu0 0.0
        %928 = vmatprep.subr.mxu0 0.0
        %929 = vmatpush1.msra.mxu0 0.0
        %930 = vmatprep.subr.mxu0 0.0
        %931 = vmatpush1.msra.mxu0 0.0
        %932 = vmatprep.subr.mxu0 0.0
        %933 = vmatpush1.msra.mxu0 0.0
        %934 = vmatprep.subr.mxu0 0.0
        %935 = vmatpush1.msra.mxu0 0.0
        %936 = vmatprep.subr.mxu0 0.0
        %937 = vmatpush1.msra.mxu0 0.0
        %938 = vmatprep.subr.mxu0 0.0
        %939 = vmatpush1.msra.mxu0 0.0
        %940 = vmatprep.subr.mxu0 0.0
        %941 = vmatpush1.msra.mxu0 0.0
        %942 = vmatprep.subr.mxu0 0.0
        %943 = vmatpush1.msra.mxu0 0.0
        %944 = vmatprep.mubr.f32.mxu0 0.0
        %945 = vmatmul.mubr.f32.gmra.mrb[0].mxu0 %v878
        %v946 = vpop.f32.mrb[0].mxu0
        %v947 = vadd.f32 0.0, %v946
        %v948 = vpop.f32.mrb[0].mxu0
        %949 = vdwg.mxu0
        %v950 = vmul.f32 %v874, %v874
        %v951 = vsub.f32 %v947, %v950
        %v952 = vmax.f32 %v951, 0.0
        %v953 = vadd.f32 %v952, 1e-06
        %v954 = vrsqrt.pop %v953
        %v955 = vld [vmem:[#allocation7] sm:$0x1]
        %v956 = vld [vmem:[#allocation8] sm:$0x1]
        %v957 = vld [vmem:[#allocation10] sm:$0xff]
        %v958 = vld [vmem:[#allocation10 + $0x8] sm:$0xf]
        %v959 = vld [vmem:[#allocation10 + $0xc] sm:$0xff]
        %v960 = vld [vmem:[#allocation10 + $0x14] sm:$0xf]
        %v961 = vld [vmem:[#allocation10 + $0x18] sm:$0xff]
        %v962 = vld [vmem:[#allocation10 + $0x20] sm:$0xf]
        %v963 = vld [vmem:[#allocation10 + $0x24] sm:$0xff]
        %v964 = vld [vmem:[#allocation10 + $0x2c] sm:$0xf]
        %v965 = vld [vmem:[#allocation10 + $0x30] sm:$0xff]
        %v966 = vld [vmem:[#allocation10 + $0x38] sm:$0xf]
        %v967 = vld [vmem:[#allocation10 + $0x3c] sm:$0xff]
        %v968 = vld [vmem:[#allocation10 + $0x44] sm:$0xf]
        %v969 = vld [vmem:[#allocation10 + $0x48] sm:$0xff]
        %v970 = vld [vmem:[#allocation10 + $0x50] sm:$0xf]
        %v971 = vld [vmem:[#allocation10 + $0x54] sm:$0xff]
        %v972 = vld [vmem:[#allocation10 + $0x5c] sm:$0xf]
        %v973 = vld [vmem:[#allocation10 + $0x60] sm:$0xff]
        %v974 = vld [vmem:[#allocation10 + $0x68] sm:$0xf]
        %v975 = vld [vmem:[#allocation10 + $0x6c] sm:$0xff]
        %v976 = vld [vmem:[#allocation10 + $0x74] sm:$0xf]
        %v977 = vld [vmem:[#allocation10 + $0x78] sm:$0xff]
        %v978 = vld [vmem:[#allocation10 + $0x80] sm:$0xf]
        %v979 = vld [vmem:[#allocation10 + $0x84] sm:$0xff]
        %v980 = vld [vmem:[#allocation10 + $0x8c] sm:$0xf]
        %v981 = vld [vmem:[#allocation10 + $0x90] sm:$0xff]
        %v982 = vld [vmem:[#allocation10 + $0x98] sm:$0xf]
        %v983 = vld [vmem:[#allocation10 + $0x9c] sm:$0xff]
        %v984 = vld [vmem:[#allocation10 + $0xa4] sm:$0xf]
        %v985 = vld [vmem:[#allocation10 + $0xa8] sm:$0xff]
        %v986 = vld [vmem:[#allocation10 + $0xb0] sm:$0xf]
        %v987 = vld [vmem:[#allocation10 + $0xb4] sm:$0xff]
        %v988 = vld [vmem:[#allocation10 + $0xbc] sm:$0xf]
        %v989 = vld [vmem:[#allocation11] sm:$0x7]
        loop: start=0, step=1, limit=2
        $region80: #{tpu_custom_call.1} parent=47 // loop_pre_header
          _
        $region81: #{tpu_custom_call.1} parent=47 // loop_header
          %s991 = sphi 0, %s995
          %p992 = scmp.ge.s32.totalorder %s991, 2
        $region82: #{tpu_custom_call.1} parent=47 // loop_header_branch
          %994 = sbr.rel (%p992) target = $region86
        $region83: #{tpu_custom_call.1} parent=47 // loop_body
          %s996 = smul.u32 %s991, 512
          %s997 = scalar_lea.vmem %s313, %s996 [#allocation2]
          %v998 = vld [vmem:[%s997] sm:$0xff]
          %v999 = vld [vmem:[%s997 + $0x8] sm:$0xff]
          %v1000 = vld [vmem:[%s997 + $0x10] sm:$0xff]
          %v1001 = vld [vmem:[%s997 + $0x18] sm:$0xff]
          %v1002 = vld [vmem:[%s997 + $0x20] sm:$0xff]
          %v1003 = vld [vmem:[%s997 + $0x28] sm:$0xff]
          %v1004 = vld [vmem:[%s997 + $0x30] sm:$0xff]
          %v1005 = vld [vmem:[%s997 + $0x38] sm:$0xff]
          %v1006 = vld [vmem:[%s997 + $0x40] sm:$0xff]
          %v1007 = vld [vmem:[%s997 + $0x48] sm:$0xff]
          %v1008 = vld [vmem:[%s997 + $0x50] sm:$0xff]
          %v1009 = vld [vmem:[%s997 + $0x58] sm:$0xff]
          %v1010 = vld [vmem:[%s997 + $0x60] sm:$0xff]
          %v1011 = vld [vmem:[%s997 + $0x68] sm:$0xff]
          %v1012 = vld [vmem:[%s997 + $0x70] sm:$0xff]
          %v1013 = vld [vmem:[%s997 + $0x78] sm:$0xff]
          %v1014 = vld [vmem:[%s997 + $0x80] sm:$0xff]
          %v1015 = vld [vmem:[%s997 + $0x88] sm:$0xff]
          %v1016 = vld [vmem:[%s997 + $0x90] sm:$0xff]
          %v1017 = vld [vmem:[%s997 + $0x98] sm:$0xff]
          %v1018 = vld [vmem:[%s997 + $0xa0] sm:$0xff]
          %v1019 = vld [vmem:[%s997 + $0xa8] sm:$0xff]
          %v1020 = vld [vmem:[%s997 + $0xb0] sm:$0xff]
          %v1021 = vld [vmem:[%s997 + $0xb8] sm:$0xff]
          %v1022 = vld [vmem:[%s997 + $0xc0] sm:$0xff]
          %v1023 = vld [vmem:[%s997 + $0xc8] sm:$0xff]
          %v1024 = vld [vmem:[%s997 + $0xd0] sm:$0xff]
          %v1025 = vld [vmem:[%s997 + $0xd8] sm:$0xff]
          %v1026 = vld [vmem:[%s997 + $0xe0] sm:$0xff]
          %v1027 = vld [vmem:[%s997 + $0xe8] sm:$0xff]
          %v1028 = vld [vmem:[%s997 + $0xf0] sm:$0xff]
          %v1029 = vld [vmem:[%s997 + $0xf8] sm:$0xff]
          %v1030 = vld [vmem:[%s997 + $0x100] sm:$0xff]
          %v1031 = vld [vmem:[%s997 + $0x108] sm:$0xff]
          %v1032 = vld [vmem:[%s997 + $0x110] sm:$0xff]
          %v1033 = vld [vmem:[%s997 + $0x118] sm:$0xff]
          %v1034 = vld [vmem:[%s997 + $0x120] sm:$0xff]
          %v1035 = vld [vmem:[%s997 + $0x128] sm:$0xff]
          %v1036 = vld [vmem:[%s997 + $0x130] sm:$0xff]
          %v1037 = vld [vmem:[%s997 + $0x138] sm:$0xff]
          %v1038 = vld [vmem:[%s997 + $0x140] sm:$0xff]
          %v1039 = vld [vmem:[%s997 + $0x148] sm:$0xff]
          %v1040 = vld [vmem:[%s997 + $0x150] sm:$0xff]
          %v1041 = vld [vmem:[%s997 + $0x158] sm:$0xff]
          %v1042 = vld [vmem:[%s997 + $0x160] sm:$0xff]
          %v1043 = vld [vmem:[%s997 + $0x168] sm:$0xff]
          %v1044 = vld [vmem:[%s997 + $0x170] sm:$0xff]
          %v1045 = vld [vmem:[%s997 + $0x178] sm:$0xff]
          %v1046 = vld [vmem:[%s997 + $0x180] sm:$0xff]
          %v1047 = vld [vmem:[%s997 + $0x188] sm:$0xff]
          %v1048 = vld [vmem:[%s997 + $0x190] sm:$0xff]
          %v1049 = vld [vmem:[%s997 + $0x198] sm:$0xff]
          %v1050 = vld [vmem:[%s997 + $0x1a0] sm:$0xff]
          %v1051 = vld [vmem:[%s997 + $0x1a8] sm:$0xff]
          %v1052 = vld [vmem:[%s997 + $0x1b0] sm:$0xff]
          %v1053 = vld [vmem:[%s997 + $0x1b8] sm:$0xff]
          %v1054 = vld [vmem:[%s997 + $0x1c0] sm:$0xff]
          %v1055 = vld [vmem:[%s997 + $0x1c8] sm:$0xff]
          %v1056 = vld [vmem:[%s997 + $0x1d0] sm:$0xff]
          %v1057 = vld [vmem:[%s997 + $0x1d8] sm:$0xff]
          %v1058 = vld [vmem:[%s997 + $0x1e0] sm:$0xff]
          %v1059 = vld [vmem:[%s997 + $0x1e8] sm:$0xff]
          %v1060 = vld [vmem:[%s997 + $0x1f0] sm:$0xff]
          %v1061 = vld [vmem:[%s997 + $0x1f8] sm:$0xff]
          %v1062 = vlaneseq
          %v1063 = vshrl.u32 %v1062, 7
          %v1064 = vsub.s32 0, %v1063
          %v1065 = vrot.slane %v874, %v1064
          %v1066 = vsub.f32 %v998, %v1065
          %v1067 = vsub.f32 %v999, %v1065
          %v1068 = vsub.f32 %v1000, %v1065
          %v1069 = vsub.f32 %v1001, %v1065
          %v1070 = vsub.f32 %v1002, %v1065
          %v1071 = vsub.f32 %v1003, %v1065
          %v1072 = vsub.f32 %v1004, %v1065
          %v1073 = vsub.f32 %v1005, %v1065
          %v1074 = vsub.f32 %v1006, %v1065
          %v1075 = vsub.f32 %v1007, %v1065
          %v1076 = vsub.f32 %v1008, %v1065
          %v1077 = vsub.f32 %v1009, %v1065
          %v1078 = vsub.f32 %v1010, %v1065
          %v1079 = vsub.f32 %v1011, %v1065
          %v1080 = vsub.f32 %v1012, %v1065
          %v1081 = vsub.f32 %v1013, %v1065
          %v1082 = vsub.f32 %v1014, %v1065
          %v1083 = vsub.f32 %v1015, %v1065
          %v1084 = vsub.f32 %v1016, %v1065
          %v1085 = vsub.f32 %v1017, %v1065
          %v1086 = vsub.f32 %v1018, %v1065
          %v1087 = vsub.f32 %v1019, %v1065
          %v1088 = vsub.f32 %v1020, %v1065
          %v1089 = vsub.f32 %v1021, %v1065
          %v1090 = vsub.f32 %v1022, %v1065
          %v1091 = vsub.f32 %v1023, %v1065
          %v1092 = vsub.f32 %v1024, %v1065
          %v1093 = vsub.f32 %v1025, %v1065
          %v1094 = vsub.f32 %v1026, %v1065
          %v1095 = vsub.f32 %v1027, %v1065
          %v1096 = vsub.f32 %v1028, %v1065
          %v1097 = vsub.f32 %v1029, %v1065
          %v1098 = vsub.f32 %v1030, %v1065
          %v1099 = vsub.f32 %v1031, %v1065
          %v1100 = vsub.f32 %v1032, %v1065
          %v1101 = vsub.f32 %v1033, %v1065
          %v1102 = vsub.f32 %v1034, %v1065
          %v1103 = vsub.f32 %v1035, %v1065
          %v1104 = vsub.f32 %v1036, %v1065
          %v1105 = vsub.f32 %v1037, %v1065
          %v1106 = vsub.f32 %v1038, %v1065
          %v1107 = vsub.f32 %v1039, %v1065
          %v1108 = vsub.f32 %v1040, %v1065
          %v1109 = vsub.f32 %v1041, %v1065
          %v1110 = vsub.f32 %v1042, %v1065
          %v1111 = vsub.f32 %v1043, %v1065
          %v1112 = vsub.f32 %v1044, %v1065
          %v1113 = vsub.f32 %v1045, %v1065
          %v1114 = vsub.f32 %v1046, %v1065
          %v1115 = vsub.f32 %v1047, %v1065
          %v1116 = vsub.f32 %v1048, %v1065
          %v1117 = vsub.f32 %v1049, %v1065
          %v1118 = vsub.f32 %v1050, %v1065
          %v1119 = vsub.f32 %v1051, %v1065
          %v1120 = vsub.f32 %v1052, %v1065
          %v1121 = vsub.f32 %v1053, %v1065
          %v1122 = vsub.f32 %v1054, %v1065
          %v1123 = vsub.f32 %v1055, %v1065
          %v1124 = vsub.f32 %v1056, %v1065
          %v1125 = vsub.f32 %v1057, %v1065
          %v1126 = vsub.f32 %v1058, %v1065
          %v1127 = vsub.f32 %v1059, %v1065
          %v1128 = vsub.f32 %v1060, %v1065
          %v1129 = vsub.f32 %v1061, %v1065
          %v1130 = vlaneseq
          %v1131 = vshrl.u32 %v1130, 7
          %v1132 = vsub.s32 0, %v1131
          %v1133 = vrot.slane %v954, %v1132
          %v1134 = vmul.f32 %v1066, %v1133
          %v1135 = vmul.f32 %v1067, %v1133
          %v1136 = vmul.f32 %v1068, %v1133
          %v1137 = vmul.f32 %v1069, %v1133
          %v1138 = vmul.f32 %v1070, %v1133
          %v1139 = vmul.f32 %v1071, %v1133
          %v1140 = vmul.f32 %v1072, %v1133
          %v1141 = vmul.f32 %v1073, %v1133
          %v1142 = vmul.f32 %v1074, %v1133
          %v1143 = vmul.f32 %v1075, %v1133
          %v1144 = vmul.f32 %v1076, %v1133
          %v1145 = vmul.f32 %v1077, %v1133
          %v1146 = vmul.f32 %v1078, %v1133
          %v1147 = vmul.f32 %v1079, %v1133
          %v1148 = vmul.f32 %v1080, %v1133
          %v1149 = vmul.f32 %v1081, %v1133
          %v1150 = vmul.f32 %v1082, %v1133
          %v1151 = vmul.f32 %v1083, %v1133
          %v1152 = vmul.f32 %v1084, %v1133
          %v1153 = vmul.f32 %v1085, %v1133
          %v1154 = vmul.f32 %v1086, %v1133
          %v1155 = vmul.f32 %v1087, %v1133
          %v1156 = vmul.f32 %v1088, %v1133
          %v1157 = vmul.f32 %v1089, %v1133
          %v1158 = vmul.f32 %v1090, %v1133
          %v1159 = vmul.f32 %v1091, %v1133
          %v1160 = vmul.f32 %v1092, %v1133
          %v1161 = vmul.f32 %v1093, %v1133
          %v1162 = vmul.f32 %v1094, %v1133
          %v1163 = vmul.f32 %v1095, %v1133
          %v1164 = vmul.f32 %v1096, %v1133
          %v1165 = vmul.f32 %v1097, %v1133
          %v1166 = vmul.f32 %v1098, %v1133
          %v1167 = vmul.f32 %v1099, %v1133
          %v1168 = vmul.f32 %v1100, %v1133
          %v1169 = vmul.f32 %v1101, %v1133
          %v1170 = vmul.f32 %v1102, %v1133
          %v1171 = vmul.f32 %v1103, %v1133
          %v1172 = vmul.f32 %v1104, %v1133
          %v1173 = vmul.f32 %v1105, %v1133
          %v1174 = vmul.f32 %v1106, %v1133
          %v1175 = vmul.f32 %v1107, %v1133
          %v1176 = vmul.f32 %v1108, %v1133
          %v1177 = vmul.f32 %v1109, %v1133
          %v1178 = vmul.f32 %v1110, %v1133
          %v1179 = vmul.f32 %v1111, %v1133
          %v1180 = vmul.f32 %v1112, %v1133
          %v1181 = vmul.f32 %v1113, %v1133
          %v1182 = vmul.f32 %v1114, %v1133
          %v1183 = vmul.f32 %v1115, %v1133
          %v1184 = vmul.f32 %v1116, %v1133
          %v1185 = vmul.f32 %v1117, %v1133
          %v1186 = vmul.f32 %v1118, %v1133
          %v1187 = vmul.f32 %v1119, %v1133
          %v1188 = vmul.f32 %v1120, %v1133
          %v1189 = vmul.f32 %v1121, %v1133
          %v1190 = vmul.f32 %v1122, %v1133
          %v1191 = vmul.f32 %v1123, %v1133
          %v1192 = vmul.f32 %v1124, %v1133
          %v1193 = vmul.f32 %v1125, %v1133
          %v1194 = vmul.f32 %v1126, %v1133
          %v1195 = vmul.f32 %v1127, %v1133
          %v1196 = vmul.f32 %v1128, %v1133
          %v1197 = vmul.f32 %v1129, %v1133
          %v1199 = vlaneseq
          %v1200 = vshrl.u32 %v1199, 7
          %v1201 = vsub.s32 0, %v1200
          %v1202 = vrot.slane %v955, %v1201
          %v1204 = vmul.f32 %v1134, %v1202
          %v1205 = vmul.f32 %v1135, %v1202
          %v1206 = vmul.f32 %v1136, %v1202
          %v1207 = vmul.f32 %v1137, %v1202
          %v1208 = vmul.f32 %v1138, %v1202
          %v1209 = vmul.f32 %v1139, %v1202
          %v1210 = vmul.f32 %v1140, %v1202
          %v1211 = vmul.f32 %v1141, %v1202
          %v1212 = vmul.f32 %v1142, %v1202
          %v1213 = vmul.f32 %v1143, %v1202
          %v1214 = vmul.f32 %v1144, %v1202
          %v1215 = vmul.f32 %v1145, %v1202
          %v1216 = vmul.f32 %v1146, %v1202
          %v1217 = vmul.f32 %v1147, %v1202
          %v1218 = vmul.f32 %v1148, %v1202
          %v1219 = vmul.f32 %v1149, %v1202
          %v1220 = vmul.f32 %v1150, %v1202
          %v1221 = vmul.f32 %v1151, %v1202
          %v1222 = vmul.f32 %v1152, %v1202
          %v1223 = vmul.f32 %v1153, %v1202
          %v1224 = vmul.f32 %v1154, %v1202
          %v1225 = vmul.f32 %v1155, %v1202
          %v1226 = vmul.f32 %v1156, %v1202
          %v1227 = vmul.f32 %v1157, %v1202
          %v1228 = vmul.f32 %v1158, %v1202
          %v1229 = vmul.f32 %v1159, %v1202
          %v1230 = vmul.f32 %v1160, %v1202
          %v1231 = vmul.f32 %v1161, %v1202
          %v1232 = vmul.f32 %v1162, %v1202
          %v1233 = vmul.f32 %v1163, %v1202
          %v1234 = vmul.f32 %v1164, %v1202
          %v1235 = vmul.f32 %v1165, %v1202
          %v1236 = vmul.f32 %v1166, %v1202
          %v1237 = vmul.f32 %v1167, %v1202
          %v1238 = vmul.f32 %v1168, %v1202
          %v1239 = vmul.f32 %v1169, %v1202
          %v1240 = vmul.f32 %v1170, %v1202
          %v1241 = vmul.f32 %v1171, %v1202
          %v1242 = vmul.f32 %v1172, %v1202
          %v1243 = vmul.f32 %v1173, %v1202
          %v1244 = vmul.f32 %v1174, %v1202
          %v1245 = vmul.f32 %v1175, %v1202
          %v1246 = vmul.f32 %v1176, %v1202
          %v1247 = vmul.f32 %v1177, %v1202
          %v1248 = vmul.f32 %v1178, %v1202
          %v1249 = vmul.f32 %v1179, %v1202
          %v1250 = vmul.f32 %v1180, %v1202
          %v1251 = vmul.f32 %v1181, %v1202
          %v1252 = vmul.f32 %v1182, %v1202
          %v1253 = vmul.f32 %v1183, %v1202
          %v1254 = vmul.f32 %v1184, %v1202
          %v1255 = vmul.f32 %v1185, %v1202
          %v1256 = vmul.f32 %v1186, %v1202
          %v1257 = vmul.f32 %v1187, %v1202
          %v1258 = vmul.f32 %v1188, %v1202
          %v1259 = vmul.f32 %v1189, %v1202
          %v1260 = vmul.f32 %v1190, %v1202
          %v1261 = vmul.f32 %v1191, %v1202
          %v1262 = vmul.f32 %v1192, %v1202
          %v1263 = vmul.f32 %v1193, %v1202
          %v1264 = vmul.f32 %v1194, %v1202
          %v1265 = vmul.f32 %v1195, %v1202
          %v1266 = vmul.f32 %v1196, %v1202
          %v1267 = vmul.f32 %v1197, %v1202
          %v1269 = vlaneseq
          %v1270 = vshrl.u32 %v1269, 7
          %v1271 = vsub.s32 0, %v1270
          %v1272 = vrot.slane %v956, %v1271
          %v1274 = vadd.f32 %v1204, %v1272
          %v1275 = vadd.f32 %v1205, %v1272
          %v1276 = vadd.f32 %v1206, %v1272
          %v1277 = vadd.f32 %v1207, %v1272
          %v1278 = vadd.f32 %v1208, %v1272
          %v1279 = vadd.f32 %v1209, %v1272
          %v1280 = vadd.f32 %v1210, %v1272
          %v1281 = vadd.f32 %v1211, %v1272
          %v1282 = vadd.f32 %v1212, %v1272
          %v1283 = vadd.f32 %v1213, %v1272
          %v1284 = vadd.f32 %v1214, %v1272
          %v1285 = vadd.f32 %v1215, %v1272
          %v1286 = vadd.f32 %v1216, %v1272
          %v1287 = vadd.f32 %v1217, %v1272
          %v1288 = vadd.f32 %v1218, %v1272
          %v1289 = vadd.f32 %v1219, %v1272
          %v1290 = vadd.f32 %v1220, %v1272
          %v1291 = vadd.f32 %v1221, %v1272
          %v1292 = vadd.f32 %v1222, %v1272
          %v1293 = vadd.f32 %v1223, %v1272
          %v1294 = vadd.f32 %v1224, %v1272
          %v1295 = vadd.f32 %v1225, %v1272
          %v1296 = vadd.f32 %v1226, %v1272
          %v1297 = vadd.f32 %v1227, %v1272
          %v1298 = vadd.f32 %v1228, %v1272
          %v1299 = vadd.f32 %v1229, %v1272
          %v1300 = vadd.f32 %v1230, %v1272
          %v1301 = vadd.f32 %v1231, %v1272
          %v1302 = vadd.f32 %v1232, %v1272
          %v1303 = vadd.f32 %v1233, %v1272
          %v1304 = vadd.f32 %v1234, %v1272
          %v1305 = vadd.f32 %v1235, %v1272
          %v1306 = vadd.f32 %v1236, %v1272
          %v1307 = vadd.f32 %v1237, %v1272
          %v1308 = vadd.f32 %v1238, %v1272
          %v1309 = vadd.f32 %v1239, %v1272
          %v1310 = vadd.f32 %v1240, %v1272
          %v1311 = vadd.f32 %v1241, %v1272
          %v1312 = vadd.f32 %v1242, %v1272
          %v1313 = vadd.f32 %v1243, %v1272
          %v1314 = vadd.f32 %v1244, %v1272
          %v1315 = vadd.f32 %v1245, %v1272
          %v1316 = vadd.f32 %v1246, %v1272
          %v1317 = vadd.f32 %v1247, %v1272
          %v1318 = vadd.f32 %v1248, %v1272
          %v1319 = vadd.f32 %v1249, %v1272
          %v1320 = vadd.f32 %v1250, %v1272
          %v1321 = vadd.f32 %v1251, %v1272
          %v1322 = vadd.f32 %v1252, %v1272
          %v1323 = vadd.f32 %v1253, %v1272
          %v1324 = vadd.f32 %v1254, %v1272
          %v1325 = vadd.f32 %v1255, %v1272
          %v1326 = vadd.f32 %v1256, %v1272
          %v1327 = vadd.f32 %v1257, %v1272
          %v1328 = vadd.f32 %v1258, %v1272
          %v1329 = vadd.f32 %v1259, %v1272
          %v1330 = vadd.f32 %v1260, %v1272
          %v1331 = vadd.f32 %v1261, %v1272
          %v1332 = vadd.f32 %v1262, %v1272
          %v1333 = vadd.f32 %v1263, %v1272
          %v1334 = vadd.f32 %v1264, %v1272
          %v1335 = vadd.f32 %v1265, %v1272
          %v1336 = vadd.f32 %v1266, %v1272
          %v1337 = vadd.f32 %v1267, %v1272
          %v1338 = vpack.c.bf16 %v1275, %v1274
          %v1339 = vpack.c.bf16 %v1277, %v1276
          %v1340 = vpack.c.bf16 %v1279, %v1278
          %v1341 = vpack.c.bf16 %v1281, %v1280
          %v1342 = vpack.c.bf16 %v1283, %v1282
          %v1343 = vpack.c.bf16 %v1285, %v1284
          %v1344 = vpack.c.bf16 %v1287, %v1286
          %v1345 = vpack.c.bf16 %v1289, %v1288
          %v1346 = vpack.c.bf16 %v1291, %v1290
          %v1347 = vpack.c.bf16 %v1293, %v1292
          %v1348 = vpack.c.bf16 %v1295, %v1294
          %v1349 = vpack.c.bf16 %v1297, %v1296
          %v1350 = vpack.c.bf16 %v1299, %v1298
          %v1351 = vpack.c.bf16 %v1301, %v1300
          %v1352 = vpack.c.bf16 %v1303, %v1302
          %v1353 = vpack.c.bf16 %v1305, %v1304
          %v1354 = vpack.c.bf16 %v1307, %v1306
          %v1355 = vpack.c.bf16 %v1309, %v1308
          %v1356 = vpack.c.bf16 %v1311, %v1310
          %v1357 = vpack.c.bf16 %v1313, %v1312
          %v1358 = vpack.c.bf16 %v1315, %v1314
          %v1359 = vpack.c.bf16 %v1317, %v1316
          %v1360 = vpack.c.bf16 %v1319, %v1318
          %v1361 = vpack.c.bf16 %v1321, %v1320
          %v1362 = vpack.c.bf16 %v1323, %v1322
          %v1363 = vpack.c.bf16 %v1325, %v1324
          %v1364 = vpack.c.bf16 %v1327, %v1326
          %v1365 = vpack.c.bf16 %v1329, %v1328
          %v1366 = vpack.c.bf16 %v1331, %v1330
          %v1367 = vpack.c.bf16 %v1333, %v1332
          %v1368 = vpack.c.bf16 %v1335, %v1334
          %v1369 = vpack.c.bf16 %v1337, %v1336
          %v1371 = vlaneseq
          %v1372 = vshrl.u32 %v1371, 7
          %v1373 = vsub.s32 0, %v1372
          %v1374 = vrot.slane %v989, %v1373
          %v1375 = vlaneseq
          %v1376 = vshrl.u32 %v1375, 7
          %v1377 = vsub.s32 1, %v1376
          %v1378 = vrot.slane %v989, %v1377
          %v1379 = vlaneseq
          %v1380 = vshrl.u32 %v1379, 7
          %v1381 = vsub.s32 2, %v1380
          %v1382 = vrot.slane %v989, %v1381
          %v1418 = vunpack.c.l.b16 %v957
          %v1419 = vunpack.c.h.b16 %v957
          %v1420 = vunpack.c.l.b16 %v958
          %v1421 = vunpack.c.l.b16 %v959
          %v1422 = vunpack.c.h.b16 %v959
          %v1423 = vunpack.c.l.b16 %v960
          %v1424 = vunpack.c.l.b16 %v961
          %v1425 = vunpack.c.h.b16 %v961
          %v1426 = vunpack.c.l.b16 %v962
          %v1427 = vunpack.c.l.b16 %v963
          %v1428 = vunpack.c.h.b16 %v963
          %v1429 = vunpack.c.l.b16 %v964
          %v1430 = vunpack.c.l.b16 %v965
          %v1431 = vunpack.c.h.b16 %v965
          %v1432 = vunpack.c.l.b16 %v966
          %v1433 = vunpack.c.l.b16 %v967
          %v1434 = vunpack.c.h.b16 %v967
          %v1435 = vunpack.c.l.b16 %v968
          %v1436 = vunpack.c.l.b16 %v969
          %v1437 = vunpack.c.h.b16 %v969
          %v1438 = vunpack.c.l.b16 %v970
          %v1439 = vunpack.c.l.b16 %v971
          %v1440 = vunpack.c.h.b16 %v971
          %v1441 = vunpack.c.l.b16 %v972
          %v1442 = vunpack.c.l.b16 %v973
          %v1443 = vunpack.c.h.b16 %v973
          %v1444 = vunpack.c.l.b16 %v974
          %v1445 = vunpack.c.l.b16 %v975
          %v1446 = vunpack.c.h.b16 %v975
          %v1447 = vunpack.c.l.b16 %v976
          %v1448 = vunpack.c.l.b16 %v977
          %v1449 = vunpack.c.h.b16 %v977
          %v1450 = vunpack.c.l.b16 %v978
          %v1451 = vunpack.c.l.b16 %v979
          %v1452 = vunpack.c.h.b16 %v979
          %v1453 = vunpack.c.l.b16 %v980
          %v1454 = vunpack.c.l.b16 %v981
          %v1455 = vunpack.c.h.b16 %v981
          %v1456 = vunpack.c.l.b16 %v982
          %v1457 = vunpack.c.l.b16 %v983
          %v1458 = vunpack.c.h.b16 %v983
          %v1459 = vunpack.c.l.b16 %v984
          %v1460 = vunpack.c.l.b16 %v985
          %v1461 = vunpack.c.h.b16 %v985
          %v1462 = vunpack.c.l.b16 %v986
          %v1463 = vunpack.c.l.b16 %v987
          %v1464 = vunpack.c.h.b16 %v987
          %v1465 = vunpack.c.l.b16 %v988
          %v1466 = vpack.c.b16 %v1421, %v1418
          %v1467 = vpack.c.b16 %v1422, %v1419
          %v1468 = vpack.c.b16 %v1423, %v1420
          %v1469 = vpack.c.b16 %v1427, %v1424
          %v1470 = vpack.c.b16 %v1428, %v1425
          %v1471 = vpack.c.b16 %v1429, %v1426
          %v1472 = vpack.c.b16 %v1433, %v1430
          %v1473 = vpack.c.b16 %v1434, %v1431
          %v1474 = vpack.c.b16 %v1435, %v1432
          %v1475 = vpack.c.b16 %v1439, %v1436
          %v1476 = vpack.c.b16 %v1440, %v1437
          %v1477 = vpack.c.b16 %v1441, %v1438
          %v1478 = vpack.c.b16 %v1445, %v1442
          %v1479 = vpack.c.b16 %v1446, %v1443
          %v1480 = vpack.c.b16 %v1447, %v1444
          %v1481 = vpack.c.b16 %v1451, %v1448
          %v1482 = vpack.c.b16 %v1452, %v1449
          %v1483 = vpack.c.b16 %v1453, %v1450
          %v1484 = vpack.c.b16 %v1457, %v1454
          %v1485 = vpack.c.b16 %v1458, %v1455
          %v1486 = vpack.c.b16 %v1459, %v1456
          %v1487 = vpack.c.b16 %v1463, %v1460
          %v1488 = vpack.c.b16 %v1464, %v1461
          %v1489 = vpack.c.b16 %v1465, %v1462
          %1514 = vmatprep.subr.bf16.mxu0 %v1467
          %1515 = vmatpush1.bf16.msra.mxu0 %v1466
          %1516 = vmatprep.subr.bf16.mxu0 %v1470
          %1517 = vmatpush1.bf16.msra.mxu0 %v1469
          %1518 = vmatprep.subr.bf16.mxu0 %v1473
          %1519 = vmatpush1.bf16.msra.mxu0 %v1472
          %1520 = vmatprep.subr.bf16.mxu0 %v1476
          %1521 = vmatpush1.bf16.msra.mxu0 %v1475
          %1522 = vmatprep.subr.bf16.mxu0 %v1479
          %1523 = vmatpush1.bf16.msra.mxu0 %v1478
          %1524 = vmatprep.subr.bf16.mxu0 %v1482
          %1525 = vmatpush1.bf16.msra.mxu0 %v1481
          %1526 = vmatprep.subr.bf16.mxu0 %v1485
          %1527 = vmatpush1.bf16.msra.mxu0 %v1484
          %1528 = vmatprep.subr.bf16.mxu0 %v1488
          %1529 = vmatpush1.bf16.msra.mxu0 %v1487
          %1530 = vmatprep.subr.bf16.mxu0 0
          %1531 = vmatpush1.bf16.msra.mxu0 0
          %1532 = vmatprep.subr.bf16.mxu0 0
          %1533 = vmatpush1.bf16.msra.mxu0 0
          %1534 = vmatprep.subr.bf16.mxu0 0
          %1535 = vmatpush1.bf16.msra.mxu0 0
          %1536 = vmatprep.subr.bf16.mxu0 0
          %1537 = vmatpush1.bf16.msra.mxu0 0
          %1538 = vmatprep.subr.bf16.mxu0 0
          %1539 = vmatpush1.bf16.msra.mxu0 0
          %1540 = vmatprep.subr.bf16.mxu0 0
          %1541 = vmatpush1.bf16.msra.mxu0 0
          %1542 = vmatprep.subr.bf16.mxu0 0
          %1543 = vmatpush1.bf16.msra.mxu0 0
          %1544 = vmatprep.subr.bf16.mxu0 0
          %1545 = vmatpush1.bf16.msra.mxu0 0
          %1546 = vmatprep.mubr.bf16.mxu0 0
          %1547 = vmatmul.mubr.bf16.gmra.mrb[0].mxu0 %v1338
          %v1548 = vpop.f32.mrb[0].mxu0
          %v1549 = vadd.f32 %v1374, %v1548
          %v1550 = vpop.f32.mrb[0].mxu0
          %v1551 = vadd.f32 %v1378, %v1550
          %v1552 = vpop.f32.mrb[0].mxu0
          %v1553 = vadd.f32 %v1374, %v1552
          %v1554 = vpop.f32.mrb[0].mxu0
          %v1555 = vadd.f32 %v1378, %v1554
          %1556 = vmatprep.mubr.bf16.mxu0 0
          %1557 = vmatmul.mubr.bf16.gmra.mrb[0].mxu0 %v1339
          %v1558 = vpop.f32.mrb[0].mxu0
          %v1559 = vadd.f32 %v1374, %v1558
          %v1560 = vpop.f32.mrb[0].mxu0
          %v1561 = vadd.f32 %v1378, %v1560
          %v1562 = vpop.f32.mrb[0].mxu0
          %v1563 = vadd.f32 %v1374, %v1562
          %v1564 = vpop.f32.mrb[0].mxu0
          %v1565 = vadd.f32 %v1378, %v1564
          %1566 = vmatprep.mubr.bf16.mxu0 0
          %1567 = vmatmul.mubr.bf16.gmra.mrb[0].mxu0 %v1340
          %v1568 = vpop.f32.mrb[0].mxu0
          %v1569 = vadd.f32 %v1374, %v1568
          %v1570 = vpop.f32.mrb[0].mxu0
          %v1571 = vadd.f32 %v1378, %v1570
          %v1572 = vpop.f32.mrb[0].mxu0
          %v1573 = vadd.f32 %v1374, %v1572
          %v1574 = vpop.f32.mrb[0].mxu0
          %v1575 = vadd.f32 %v1378, %v1574
          %1576 = vmatprep.mubr.bf16.mxu0 0
          %1577 = vmatmul.mubr.bf16.gmra.mrb[0].mxu0 %v1341
          %v1578 = vpop.f32.mrb[0].mxu0
          %v1579 = vadd.f32 %v1374, %v1578
          %v1580 = vpop.f32.mrb[0].mxu0
          %v1581 = vadd.f32 %v1378, %v1580
          %v1582 = vpop.f32.mrb[0].mxu0
          %v1583 = vadd.f32 %v1374, %v1582
          %v1584 = vpop.f32.mrb[0].mxu0
          %v1585 = vadd.f32 %v1378, %v1584
          %1586 = vmatprep.mubr.bf16.mxu0 0
          %1587 = vmatmul.mubr.bf16.gmra.mrb[0].mxu0 %v1342
          %v1588 = vpop.f32.mrb[0].mxu0
          %v1589 = vadd.f32 %v1374, %v1588
          %v1590 = vpop.f32.mrb[0].mxu0
          %v1591 = vadd.f32 %v1378, %v1590
          %v1592 = vpop.f32.mrb[0].mxu0
          %v1593 = vadd.f32 %v1374, %v1592
          %v1594 = vpop.f32.mrb[0].mxu0
          %v1595 = vadd.f32 %v1378, %v1594
          %1596 = vmatprep.mubr.bf16.mxu0 0
          %1597 = vmatmul.mubr.bf16.gmra.mrb[0].mxu0 %v1343
          %v1598 = vpop.f32.mrb[0].mxu0
          %v1599 = vadd.f32 %v1374, %v1598
          %v1600 = vpop.f32.mrb[0].mxu0
          %v1601 = vadd.f32 %v1378, %v1600
          %v1602 = vpop.f32.mrb[0].mxu0
          %v1603 = vadd.f32 %v1374, %v1602
          %v1604 = vpop.f32.mrb[0].mxu0
          %v1605 = vadd.f32 %v1378, %v1604
          %1606 = vmatprep.mubr.bf16.mxu0 0
          %1607 = vmatmul.mubr.bf16.gmra.mrb[0].mxu0 %v1344
          %v1608 = vpop.f32.mrb[0].mxu0
          %v1609 = vadd.f32 %v1374, %v1608
          %v1610 = vpop.f32.mrb[0].mxu0
          %v1611 = vadd.f32 %v1378, %v1610
          %v1612 = vpop.f32.mrb[0].mxu0
          %v1613 = vadd.f32 %v1374, %v1612
          %v1614 = vpop.f32.mrb[0].mxu0
          %v1615 = vadd.f32 %v1378, %v1614
          %1616 = vmatprep.mubr.bf16.mxu0 0
          %1617 = vmatmul.mubr.bf16.gmra.mrb[0].mxu0 %v1345
          %v1618 = vpop.f32.mrb[0].mxu0
          %v1619 = vadd.f32 %v1374, %v1618
          %v1620 = vpop.f32.mrb[0].mxu0
          %v1621 = vadd.f32 %v1378, %v1620
          %v1622 = vpop.f32.mrb[0].mxu0
          %v1623 = vadd.f32 %v1374, %v1622
          %v1624 = vpop.f32.mrb[0].mxu0
          %v1625 = vadd.f32 %v1378, %v1624
          %1626 = vmatprep.mubr.bf16.mxu0 0
          %1627 = vmatmul.mubr.bf16.gmra.mrb[0].mxu0 %v1346
          %v1628 = vpop.f32.mrb[0].mxu0
          %v1629 = vadd.f32 %v1374, %v1628
          %v1630 = vpop.f32.mrb[0].mxu0
          %v1631 = vadd.f32 %v1378, %v1630
          %v1632 = vpop.f32.mrb[0].mxu0
          %v1633 = vadd.f32 %v1374, %v1632
          %v1634 = vpop.f32.mrb[0].mxu0
          %v1635 = vadd.f32 %v1378, %v1634
          %1636 = vmatprep.mubr.bf16.mxu0 0
          %1637 = vmatmul.mubr.bf16.gmra.mrb[0].mxu0 %v1347
          %v1638 = vpop.f32.mrb[0].mxu0
          %v1639 = vadd.f32 %v1374, %v1638
          %v1640 = vpop.f32.mrb[0].mxu0
          %v1641 = vadd.f32 %v1378, %v1640
          %v1642 = vpop.f32.mrb[0].mxu0
          %v1643 = vadd.f32 %v1374, %v1642
          %v1644 = vpop.f32.mrb[0].mxu0
          %v1645 = vadd.f32 %v1378, %v1644
          %1646 = vmatprep.mubr.bf16.mxu0 0
          %1647 = vmatmul.mubr.bf16.gmra.mrb[0].mxu0 %v1348
          %v1648 = vpop.f32.mrb[0].mxu0
          %v1649 = vadd.f32 %v1374, %v1648
          %v1650 = vpop.f32.mrb[0].mxu0
          %v1651 = vadd.f32 %v1378, %v1650
          %v1652 = vpop.f32.mrb[0].mxu0
          %v1653 = vadd.f32 %v1374, %v1652
          %v1654 = vpop.f32.mrb[0].mxu0
          %v1655 = vadd.f32 %v1378, %v1654
          %1656 = vmatprep.mubr.bf16.mxu0 0
          %1657 = vmatmul.mubr.bf16.gmra.mrb[0].mxu0 %v1349
          %v1658 = vpop.f32.mrb[0].mxu0
          %v1659 = vadd.f32 %v1374, %v1658
          %v1660 = vpop.f32.mrb[0].mxu0
          %v1661 = vadd.f32 %v1378, %v1660
          %v1662 = vpop.f32.mrb[0].mxu0
          %v1663 = vadd.f32 %v1374, %v1662
          %v1664 = vpop.f32.mrb[0].mxu0
          %v1665 = vadd.f32 %v1378, %v1664
          %1666 = vmatprep.mubr.bf16.mxu0 0
          %1667 = vmatmul.mubr.bf16.gmra.mrb[0].mxu0 %v1350
          %v1668 = vpop.f32.mrb[0].mxu0
          %v1669 = vadd.f32 %v1374, %v1668
          %v1670 = vpop.f32.mrb[0].mxu0
          %v1671 = vadd.f32 %v1378, %v1670
          %v1672 = vpop.f32.mrb[0].mxu0
          %v1673 = vadd.f32 %v1374, %v1672
          %v1674 = vpop.f32.mrb[0].mxu0
          %v1675 = vadd.f32 %v1378, %v1674
          %1676 = vmatprep.mubr.bf16.mxu0 0
          %1677 = vmatmul.mubr.bf16.gmra.mrb[0].mxu0 %v1351
          %v1678 = vpop.f32.mrb[0].mxu0
          %v1679 = vadd.f32 %v1374, %v1678
          %v1680 = vpop.f32.mrb[0].mxu0
          %v1681 = vadd.f32 %v1378, %v1680
          %v1682 = vpop.f32.mrb[0].mxu0
          %v1683 = vadd.f32 %v1374, %v1682
          %v1684 = vpop.f32.mrb[0].mxu0
          %v1685 = vadd.f32 %v1378, %v1684
          %1686 = vmatprep.mubr.bf16.mxu0 0
          %1687 = vmatmul.mubr.bf16.gmra.mrb[0].mxu0 %v1352
          %v1688 = vpop.f32.mrb[0].mxu0
          %v1689 = vadd.f32 %v1374, %v1688
          %v1690 = vpop.f32.mrb[0].mxu0
          %v1691 = vadd.f32 %v1378, %v1690
          %v1692 = vpop.f32.mrb[0].mxu0
          %v1693 = vadd.f32 %v1374, %v1692
          %v1694 = vpop.f32.mrb[0].mxu0
          %v1695 = vadd.f32 %v1378, %v1694
          %1696 = vmatprep.mubr.bf16.mxu0 0
          %1697 = vmatmul.mubr.bf16.gmra.mrb[0].mxu0 %v1353
          %v1698 = vpop.f32.mrb[0].mxu0
          %v1699 = vadd.f32 %v1374, %v1698
          %v1700 = vpop.f32.mrb[0].mxu0
          %v1701 = vadd.f32 %v1378, %v1700
          %v1702 = vpop.f32.mrb[0].mxu0
          %v1703 = vadd.f32 %v1374, %v1702
          %v1704 = vpop.f32.mrb[0].mxu0
          %v1705 = vadd.f32 %v1378, %v1704
          %1706 = vmatprep.mubr.bf16.mxu0 0
          %1707 = vmatmul.mubr.bf16.gmra.mrb[0].mxu0 %v1354
          %v1708 = vpop.f32.mrb[0].mxu0
          %v1709 = vadd.f32 %v1374, %v1708
          %v1710 = vpop.f32.mrb[0].mxu0
          %v1711 = vadd.f32 %v1378, %v1710
          %v1712 = vpop.f32.mrb[0].mxu0
          %v1713 = vadd.f32 %v1374, %v1712
          %v1714 = vpop.f32.mrb[0].mxu0
          %v1715 = vadd.f32 %v1378, %v1714
          %1716 = vmatprep.mubr.bf16.mxu0 0
          %1717 = vmatmul.mubr.bf16.gmra.mrb[0].mxu0 %v1355
          %v1718 = vpop.f32.mrb[0].mxu0
          %v1719 = vadd.f32 %v1374, %v1718
          %v1720 = vpop.f32.mrb[0].mxu0
          %v1721 = vadd.f32 %v1378, %v1720
          %v1722 = vpop.f32.mrb[0].mxu0
          %v1723 = vadd.f32 %v1374, %v1722
          %v1724 = vpop.f32.mrb[0].mxu0
          %v1725 = vadd.f32 %v1378, %v1724
          %1726 = vmatprep.mubr.bf16.mxu0 0
          %1727 = vmatmul.mubr.bf16.gmra.mrb[0].mxu0 %v1356
          %v1728 = vpop.f32.mrb[0].mxu0
          %v1729 = vadd.f32 %v1374, %v1728
          %v1730 = vpop.f32.mrb[0].mxu0
          %v1731 = vadd.f32 %v1378, %v1730
          %v1732 = vpop.f32.mrb[0].mxu0
          %v1733 = vadd.f32 %v1374, %v1732
          %v1734 = vpop.f32.mrb[0].mxu0
          %v1735 = vadd.f32 %v1378, %v1734
          %1736 = vmatprep.mubr.bf16.mxu0 0
          %1737 = vmatmul.mubr.bf16.gmra.mrb[0].mxu0 %v1357
          %v1738 = vpop.f32.mrb[0].mxu0
          %v1739 = vadd.f32 %v1374, %v1738
          %v1740 = vpop.f32.mrb[0].mxu0
          %v1741 = vadd.f32 %v1378, %v1740
          %v1742 = vpop.f32.mrb[0].mxu0
          %v1743 = vadd.f32 %v1374, %v1742
          %v1744 = vpop.f32.mrb[0].mxu0
          %v1745 = vadd.f32 %v1378, %v1744
          %1746 = vmatprep.mubr.bf16.mxu0 0
          %1747 = vmatmul.mubr.bf16.gmra.mrb[0].mxu0 %v1358
          %v1748 = vpop.f32.mrb[0].mxu0
          %v1749 = vadd.f32 %v1374, %v1748
          %v1750 = vpop.f32.mrb[0].mxu0
          %v1751 = vadd.f32 %v1378, %v1750
          %v1752 = vpop.f32.mrb[0].mxu0
          %v1753 = vadd.f32 %v1374, %v1752
          %v1754 = vpop.f32.mrb[0].mxu0
          %v1755 = vadd.f32 %v1378, %v1754
          %1756 = vmatprep.mubr.bf16.mxu0 0
          %1757 = vmatmul.mubr.bf16.gmra.mrb[0].mxu0 %v1359
          %v1758 = vpop.f32.mrb[0].mxu0
          %v1759 = vadd.f32 %v1374, %v1758
          %v1760 = vpop.f32.mrb[0].mxu0
          %v1761 = vadd.f32 %v1378, %v1760
          %v1762 = vpop.f32.mrb[0].mxu0
          %v1763 = vadd.f32 %v1374, %v1762
          %v1764 = vpop.f32.mrb[0].mxu0
          %v1765 = vadd.f32 %v1378, %v1764
          %1766 = vmatprep.mubr.bf16.mxu0 0
          %1767 = vmatmul.mubr.bf16.gmra.mrb[0].mxu0 %v1360
          %v1768 = vpop.f32.mrb[0].mxu0
          %v1769 = vadd.f32 %v1374, %v1768
          %v1770 = vpop.f32.mrb[0].mxu0
          %v1771 = vadd.f32 %v1378, %v1770
          %v1772 = vpop.f32.mrb[0].mxu0
          %v1773 = vadd.f32 %v1374, %v1772
          %v1774 = vpop.f32.mrb[0].mxu0
          %v1775 = vadd.f32 %v1378, %v1774
          %1776 = vmatprep.mubr.bf16.mxu0 0
          %1777 = vmatmul.mubr.bf16.gmra.mrb[0].mxu0 %v1361
          %v1778 = vpop.f32.mrb[0].mxu0
          %v1779 = vadd.f32 %v1374, %v1778
          %v1780 = vpop.f32.mrb[0].mxu0
          %v1781 = vadd.f32 %v1378, %v1780
          %v1782 = vpop.f32.mrb[0].mxu0
          %v1783 = vadd.f32 %v1374, %v1782
          %v1784 = vpop.f32.mrb[0].mxu0
          %v1785 = vadd.f32 %v1378, %v1784
          %1786 = vmatprep.mubr.bf16.mxu0 0
          %1787 = vmatmul.mubr.bf16.gmra.mrb[0].mxu0 %v1362
          %v1788 = vpop.f32.mrb[0].mxu0
          %v1789 = vadd.f32 %v1374, %v1788
          %v1790 = vpop.f32.mrb[0].mxu0
          %v1791 = vadd.f32 %v1378, %v1790
          %v1792 = vpop.f32.mrb[0].mxu0
          %v1793 = vadd.f32 %v1374, %v1792
          %v1794 = vpop.f32.mrb[0].mxu0
          %v1795 = vadd.f32 %v1378, %v1794
          %1796 = vmatprep.mubr.bf16.mxu0 0
          %1797 = vmatmul.mubr.bf16.gmra.mrb[0].mxu0 %v1363
          %v1798 = vpop.f32.mrb[0].mxu0
          %v1799 = vadd.f32 %v1374, %v1798
          %v1800 = vpop.f32.mrb[0].mxu0
          %v1801 = vadd.f32 %v1378, %v1800
          %v1802 = vpop.f32.mrb[0].mxu0
          %v1803 = vadd.f32 %v1374, %v1802
          %v1804 = vpop.f32.mrb[0].mxu0
          %v1805 = vadd.f32 %v1378, %v1804
          %1806 = vmatprep.mubr.bf16.mxu0 0
          %1807 = vmatmul.mubr.bf16.gmra.mrb[0].mxu0 %v1364
          %v1808 = vpop.f32.mrb[0].mxu0
          %v1809 = vadd.f32 %v1374, %v1808
          %v1810 = vpop.f32.mrb[0].mxu0
          %v1811 = vadd.f32 %v1378, %v1810
          %v1812 = vpop.f32.mrb[0].mxu0
          %v1813 = vadd.f32 %v1374, %v1812
          %v1814 = vpop.f32.mrb[0].mxu0
          %v1815 = vadd.f32 %v1378, %v1814
          %1816 = vmatprep.mubr.bf16.mxu0 0
          %1817 = vmatmul.mubr.bf16.gmra.mrb[0].mxu0 %v1365
          %v1818 = vpop.f32.mrb[0].mxu0
          %v1819 = vadd.f32 %v1374, %v1818
          %v1820 = vpop.f32.mrb[0].mxu0
          %v1821 = vadd.f32 %v1378, %v1820
          %v1822 = vpop.f32.mrb[0].mxu0
          %v1823 = vadd.f32 %v1374, %v1822
          %v1824 = vpop.f32.mrb[0].mxu0
          %v1825 = vadd.f32 %v1378, %v1824
          %1826 = vmatprep.mubr.bf16.mxu0 0
          %1827 = vmatmul.mubr.bf16.gmra.mrb[0].mxu0 %v1366
          %v1828 = vpop.f32.mrb[0].mxu0
          %v1829 = vadd.f32 %v1374, %v1828
          %v1830 = vpop.f32.mrb[0].mxu0
          %v1831 = vadd.f32 %v1378, %v1830
          %v1832 = vpop.f32.mrb[0].mxu0
          %v1833 = vadd.f32 %v1374, %v1832
          %v1834 = vpop.f32.mrb[0].mxu0
          %v1835 = vadd.f32 %v1378, %v1834
          %1836 = vmatprep.mubr.bf16.mxu0 0
          %1837 = vmatmul.mubr.bf16.gmra.mrb[0].mxu0 %v1367
          %v1838 = vpop.f32.mrb[0].mxu0
          %v1839 = vadd.f32 %v1374, %v1838
          %v1840 = vpop.f32.mrb[0].mxu0
          %v1841 = vadd.f32 %v1378, %v1840
          %v1842 = vpop.f32.mrb[0].mxu0
          %v1843 = vadd.f32 %v1374, %v1842
          %v1844 = vpop.f32.mrb[0].mxu0
          %v1845 = vadd.f32 %v1378, %v1844
          %1846 = vmatprep.mubr.bf16.mxu0 0
          %1847 = vmatmul.mubr.bf16.gmra.mrb[0].mxu0 %v1368
          %v1848 = vpop.f32.mrb[0].mxu0
          %v1849 = vadd.f32 %v1374, %v1848
          %v1850 = vpop.f32.mrb[0].mxu0
          %v1851 = vadd.f32 %v1378, %v1850
          %v1852 = vpop.f32.mrb[0].mxu0
          %v1853 = vadd.f32 %v1374, %v1852
          %v1854 = vpop.f32.mrb[0].mxu0
          %v1855 = vadd.f32 %v1378, %v1854
          %1856 = vmatprep.mubr.bf16.mxu0 0
          %1857 = vmatmul.mubr.bf16.gmra.mrb[0].mxu0 %v1369
          %v1858 = vpop.f32.mrb[0].mxu0
          %v1859 = vadd.f32 %v1374, %v1858
          %v1860 = vpop.f32.mrb[0].mxu0
          %v1861 = vadd.f32 %v1378, %v1860
          %v1862 = vpop.f32.mrb[0].mxu0
          %v1863 = vadd.f32 %v1374, %v1862
          %v1864 = vpop.f32.mrb[0].mxu0
          %v1865 = vadd.f32 %v1378, %v1864
          %1866 = vdwg.mxu0
          %1867 = vmatprep.subr.bf16.mxu0 0
          %1868 = vmatpush1.bf16.msra.mxu0 %v1468
          %1869 = vmatprep.subr.bf16.mxu0 0
          %1870 = vmatpush1.bf16.msra.mxu0 %v1471
          %1871 = vmatprep.subr.bf16.mxu0 0
          %1872 = vmatpush1.bf16.msra.mxu0 %v1474
          %1873 = vmatprep.subr.bf16.mxu0 0
          %1874 = vmatpush1.bf16.msra.mxu0 %v1477
          %1875 = vmatprep.subr.bf16.mxu0 0
          %1876 = vmatpush1.bf16.msra.mxu0 %v1480
          %1877 = vmatprep.subr.bf16.mxu0 0
          %1878 = vmatpush1.bf16.msra.mxu0 %v1483
          %1879 = vmatprep.subr.bf16.mxu0 0
          %1880 = vmatpush1.bf16.msra.mxu0 %v1486
          %1881 = vmatprep.subr.bf16.mxu0 0
          %1882 = vmatpush1.bf16.msra.mxu0 %v1489
          %1883 = vmatprep.subr.bf16.mxu0 0
          %1884 = vmatpush1.bf16.msra.mxu0 0
          %1885 = vmatprep.subr.bf16.mxu0 0
          %1886 = vmatpush1.bf16.msra.mxu0 0
          %1887 = vmatprep.subr.bf16.mxu0 0
          %1888 = vmatpush1.bf16.msra.mxu0 0
          %1889 = vmatprep.subr.bf16.mxu0 0
          %1890 = vmatpush1.bf16.msra.mxu0 0
          %1891 = vmatprep.subr.bf16.mxu0 0
          %1892 = vmatpush1.bf16.msra.mxu0 0
          %1893 = vmatprep.subr.bf16.mxu0 0
          %1894 = vmatpush1.bf16.msra.mxu0 0
          %1895 = vmatprep.subr.bf16.mxu0 0
          %1896 = vmatpush1.bf16.msra.mxu0 0
          %1897 = vmatprep.subr.bf16.mxu0 0
          %1898 = vmatpush1.bf16.msra.mxu0 0
          %1899 = vmatprep.mubr.bf16.mxu0 0
          %1900 = vmatmul.mubr.bf16.gmra.mrb[0].mxu0 %v1338
          %v1901 = vpop.f32.mrb[0].mxu0
          %v1902 = vadd.f32 %v1382, %v1901
          %v1903 = vpop.f32.mrb[0].mxu0
          %v1904 = vpop.f32.mrb[0].mxu0
          %v1905 = vadd.f32 %v1382, %v1904
          %v1906 = vpop.f32.mrb[0].mxu0
          %1907 = vmatprep.mubr.bf16.mxu0 0
          %1908 = vmatmul.mubr.bf16.gmra.mrb[0].mxu0 %v1339
          %v1909 = vpop.f32.mrb[0].mxu0
          %v1910 = vadd.f32 %v1382, %v1909
          %v1911 = vpop.f32.mrb[0].mxu0
          %v1912 = vpop.f32.mrb[0].mxu0
          %v1913 = vadd.f32 %v1382, %v1912
          %v1914 = vpop.f32.mrb[0].mxu0
          %1915 = vmatprep.mubr.bf16.mxu0 0
          %1916 = vmatmul.mubr.bf16.gmra.mrb[0].mxu0 %v1340
          %v1917 = vpop.f32.mrb[0].mxu0
          %v1918 = vadd.f32 %v1382, %v1917
          %v1919 = vpop.f32.mrb[0].mxu0
          %v1920 = vpop.f32.mrb[0].mxu0
          %v1921 = vadd.f32 %v1382, %v1920
          %v1922 = vpop.f32.mrb[0].mxu0
          %1923 = vmatprep.mubr.bf16.mxu0 0
          %1924 = vmatmul.mubr.bf16.gmra.mrb[0].mxu0 %v1341
          %v1925 = vpop.f32.mrb[0].mxu0
          %v1926 = vadd.f32 %v1382, %v1925
          %v1927 = vpop.f32.mrb[0].mxu0
          %v1928 = vpop.f32.mrb[0].mxu0
          %v1929 = vadd.f32 %v1382, %v1928
          %v1930 = vpop.f32.mrb[0].mxu0
          %1931 = vmatprep.mubr.bf16.mxu0 0
          %1932 = vmatmul.mubr.bf16.gmra.mrb[0].mxu0 %v1342
          %v1933 = vpop.f32.mrb[0].mxu0
          %v1934 = vadd.f32 %v1382, %v1933
          %v1935 = vpop.f32.mrb[0].mxu0
          %v1936 = vpop.f32.mrb[0].mxu0
          %v1937 = vadd.f32 %v1382, %v1936
          %v1938 = vpop.f32.mrb[0].mxu0
          %1939 = vmatprep.mubr.bf16.mxu0 0
          %1940 = vmatmul.mubr.bf16.gmra.mrb[0].mxu0 %v1343
          %v1941 = vpop.f32.mrb[0].mxu0
          %v1942 = vadd.f32 %v1382, %v1941
          %v1943 = vpop.f32.mrb[0].mxu0
          %v1944 = vpop.f32.mrb[0].mxu0
          %v1945 = vadd.f32 %v1382, %v1944
          %v1946 = vpop.f32.mrb[0].mxu0
          %1947 = vmatprep.mubr.bf16.mxu0 0
          %1948 = vmatmul.mubr.bf16.gmra.mrb[0].mxu0 %v1344
          %v1949 = vpop.f32.mrb[0].mxu0
          %v1950 = vadd.f32 %v1382, %v1949
          %v1951 = vpop.f32.mrb[0].mxu0
          %v1952 = vpop.f32.mrb[0].mxu0
          %v1953 = vadd.f32 %v1382, %v1952
          %v1954 = vpop.f32.mrb[0].mxu0
          %1955 = vmatprep.mubr.bf16.mxu0 0
          %1956 = vmatmul.mubr.bf16.gmra.mrb[0].mxu0 %v1345
          %v1957 = vpop.f32.mrb[0].mxu0
          %v1958 = vadd.f32 %v1382, %v1957
          %v1959 = vpop.f32.mrb[0].mxu0
          %v1960 = vpop.f32.mrb[0].mxu0
          %v1961 = vadd.f32 %v1382, %v1960
          %v1962 = vpop.f32.mrb[0].mxu0
          %1963 = vmatprep.mubr.bf16.mxu0 0
          %1964 = vmatmul.mubr.bf16.gmra.mrb[0].mxu0 %v1346
          %v1965 = vpop.f32.mrb[0].mxu0
          %v1966 = vadd.f32 %v1382, %v1965
          %v1967 = vpop.f32.mrb[0].mxu0
          %v1968 = vpop.f32.mrb[0].mxu0
          %v1969 = vadd.f32 %v1382, %v1968
          %v1970 = vpop.f32.mrb[0].mxu0
          %1971 = vmatprep.mubr.bf16.mxu0 0
          %1972 = vmatmul.mubr.bf16.gmra.mrb[0].mxu0 %v1347
          %v1973 = vpop.f32.mrb[0].mxu0
          %v1974 = vadd.f32 %v1382, %v1973
          %v1975 = vpop.f32.mrb[0].mxu0
          %v1976 = vpop.f32.mrb[0].mxu0
          %v1977 = vadd.f32 %v1382, %v1976
          %v1978 = vpop.f32.mrb[0].mxu0
          %1979 = vmatprep.mubr.bf16.mxu0 0
          %1980 = vmatmul.mubr.bf16.gmra.mrb[0].mxu0 %v1348
          %v1981 = vpop.f32.mrb[0].mxu0
          %v1982 = vadd.f32 %v1382, %v1981
          %v1983 = vpop.f32.mrb[0].mxu0
          %v1984 = vpop.f32.mrb[0].mxu0
          %v1985 = vadd.f32 %v1382, %v1984
          %v1986 = vpop.f32.mrb[0].mxu0
          %1987 = vmatprep.mubr.bf16.mxu0 0
          %1988 = vmatmul.mubr.bf16.gmra.mrb[0].mxu0 %v1349
          %v1989 = vpop.f32.mrb[0].mxu0
          %v1990 = vadd.f32 %v1382, %v1989
          %v1991 = vpop.f32.mrb[0].mxu0
          %v1992 = vpop.f32.mrb[0].mxu0
          %v1993 = vadd.f32 %v1382, %v1992
          %v1994 = vpop.f32.mrb[0].mxu0
          %1995 = vmatprep.mubr.bf16.mxu0 0
          %1996 = vmatmul.mubr.bf16.gmra.mrb[0].mxu0 %v1350
          %v1997 = vpop.f32.mrb[0].mxu0
          %v1998 = vadd.f32 %v1382, %v1997
          %v1999 = vpop.f32.mrb[0].mxu0
          %v2000 = vpop.f32.mrb[0].mxu0
          %v2001 = vadd.f32 %v1382, %v2000
          %v2002 = vpop.f32.mrb[0].mxu0
          %2003 = vmatprep.mubr.bf16.mxu0 0
          %2004 = vmatmul.mubr.bf16.gmra.mrb[0].mxu0 %v1351
          %v2005 = vpop.f32.mrb[0].mxu0
          %v2006 = vadd.f32 %v1382, %v2005
          %v2007 = vpop.f32.mrb[0].mxu0
          %v2008 = vpop.f32.mrb[0].mxu0
          %v2009 = vadd.f32 %v1382, %v2008
          %v2010 = vpop.f32.mrb[0].mxu0
          %2011 = vmatprep.mubr.bf16.mxu0 0
          %2012 = vmatmul.mubr.bf16.gmra.mrb[0].mxu0 %v1352
          %v2013 = vpop.f32.mrb[0].mxu0
          %v2014 = vadd.f32 %v1382, %v2013
          %v2015 = vpop.f32.mrb[0].mxu0
          %v2016 = vpop.f32.mrb[0].mxu0
          %v2017 = vadd.f32 %v1382, %v2016
          %v2018 = vpop.f32.mrb[0].mxu0
          %2019 = vmatprep.mubr.bf16.mxu0 0
          %2020 = vmatmul.mubr.bf16.gmra.mrb[0].mxu0 %v1353
          %v2021 = vpop.f32.mrb[0].mxu0
          %v2022 = vadd.f32 %v1382, %v2021
          %v2023 = vpop.f32.mrb[0].mxu0
          %v2024 = vpop.f32.mrb[0].mxu0
          %v2025 = vadd.f32 %v1382, %v2024
          %v2026 = vpop.f32.mrb[0].mxu0
          %2027 = vmatprep.mubr.bf16.mxu0 0
          %2028 = vmatmul.mubr.bf16.gmra.mrb[0].mxu0 %v1354
          %v2029 = vpop.f32.mrb[0].mxu0
          %v2030 = vadd.f32 %v1382, %v2029
          %v2031 = vpop.f32.mrb[0].mxu0
          %v2032 = vpop.f32.mrb[0].mxu0
          %v2033 = vadd.f32 %v1382, %v2032
          %v2034 = vpop.f32.mrb[0].mxu0
          %2035 = vmatprep.mubr.bf16.mxu0 0
          %2036 = vmatmul.mubr.bf16.gmra.mrb[0].mxu0 %v1355
          %v2037 = vpop.f32.mrb[0].mxu0
          %v2038 = vadd.f32 %v1382, %v2037
          %v2039 = vpop.f32.mrb[0].mxu0
          %v2040 = vpop.f32.mrb[0].mxu0
          %v2041 = vadd.f32 %v1382, %v2040
          %v2042 = vpop.f32.mrb[0].mxu0
          %2043 = vmatprep.mubr.bf16.mxu0 0
          %2044 = vmatmul.mubr.bf16.gmra.mrb[0].mxu0 %v1356
          %v2045 = vpop.f32.mrb[0].mxu0
          %v2046 = vadd.f32 %v1382, %v2045
          %v2047 = vpop.f32.mrb[0].mxu0
          %v2048 = vpop.f32.mrb[0].mxu0
          %v2049 = vadd.f32 %v1382, %v2048
          %v2050 = vpop.f32.mrb[0].mxu0
          %2051 = vmatprep.mubr.bf16.mxu0 0
          %2052 = vmatmul.mubr.bf16.gmra.mrb[0].mxu0 %v1357
          %v2053 = vpop.f32.mrb[0].mxu0
          %v2054 = vadd.f32 %v1382, %v2053
          %v2055 = vpop.f32.mrb[0].mxu0
          %v2056 = vpop.f32.mrb[0].mxu0
          %v2057 = vadd.f32 %v1382, %v2056
          %v2058 = vpop.f32.mrb[0].mxu0
          %2059 = vmatprep.mubr.bf16.mxu0 0
          %2060 = vmatmul.mubr.bf16.gmra.mrb[0].mxu0 %v1358
          %v2061 = vpop.f32.mrb[0].mxu0
          %v2062 = vadd.f32 %v1382, %v2061
          %v2063 = vpop.f32.mrb[0].mxu0
          %v2064 = vpop.f32.mrb[0].mxu0
          %v2065 = vadd.f32 %v1382, %v2064
          %v2066 = vpop.f32.mrb[0].mxu0
          %2067 = vmatprep.mubr.bf16.mxu0 0
          %2068 = vmatmul.mubr.bf16.gmra.mrb[0].mxu0 %v1359
          %v2069 = vpop.f32.mrb[0].mxu0
          %v2070 = vadd.f32 %v1382, %v2069
          %v2071 = vpop.f32.mrb[0].mxu0
          %v2072 = vpop.f32.mrb[0].mxu0
          %v2073 = vadd.f32 %v1382, %v2072
          %v2074 = vpop.f32.mrb[0].mxu0
          %2075 = vmatprep.mubr.bf16.mxu0 0
          %2076 = vmatmul.mubr.bf16.gmra.mrb[0].mxu0 %v1360
          %v2077 = vpop.f32.mrb[0].mxu0
          %v2078 = vadd.f32 %v1382, %v2077
          %v2079 = vpop.f32.mrb[0].mxu0
          %v2080 = vpop.f32.mrb[0].mxu0
          %v2081 = vadd.f32 %v1382, %v2080
          %v2082 = vpop.f32.mrb[0].mxu0
          %2083 = vmatprep.mubr.bf16.mxu0 0
          %2084 = vmatmul.mubr.bf16.gmra.mrb[0].mxu0 %v1361
          %v2085 = vpop.f32.mrb[0].mxu0
          %v2086 = vadd.f32 %v1382, %v2085
          %v2087 = vpop.f32.mrb[0].mxu0
          %v2088 = vpop.f32.mrb[0].mxu0
          %v2089 = vadd.f32 %v1382, %v2088
          %v2090 = vpop.f32.mrb[0].mxu0
          %2091 = vmatprep.mubr.bf16.mxu0 0
          %2092 = vmatmul.mubr.bf16.gmra.mrb[0].mxu0 %v1362
          %v2093 = vpop.f32.mrb[0].mxu0
          %v2094 = vadd.f32 %v1382, %v2093
          %v2095 = vpop.f32.mrb[0].mxu0
          %v2096 = vpop.f32.mrb[0].mxu0
          %v2097 = vadd.f32 %v1382, %v2096
          %v2098 = vpop.f32.mrb[0].mxu0
          %2099 = vmatprep.mubr.bf16.mxu0 0
          %2100 = vmatmul.mubr.bf16.gmra.mrb[0].mxu0 %v1363
          %v2101 = vpop.f32.mrb[0].mxu0
          %v2102 = vadd.f32 %v1382, %v2101
          %v2103 = vpop.f32.mrb[0].mxu0
          %v2104 = vpop.f32.mrb[0].mxu0
          %v2105 = vadd.f32 %v1382, %v2104
          %v2106 = vpop.f32.mrb[0].mxu0
          %2107 = vmatprep.mubr.bf16.mxu0 0
          %2108 = vmatmul.mubr.bf16.gmra.mrb[0].mxu0 %v1364
          %v2109 = vpop.f32.mrb[0].mxu0
          %v2110 = vadd.f32 %v1382, %v2109
          %v2111 = vpop.f32.mrb[0].mxu0
          %v2112 = vpop.f32.mrb[0].mxu0
          %v2113 = vadd.f32 %v1382, %v2112
          %v2114 = vpop.f32.mrb[0].mxu0
          %2115 = vmatprep.mubr.bf16.mxu0 0
          %2116 = vmatmul.mubr.bf16.gmra.mrb[0].mxu0 %v1365
          %v2117 = vpop.f32.mrb[0].mxu0
          %v2118 = vadd.f32 %v1382, %v2117
          %v2119 = vpop.f32.mrb[0].mxu0
          %v2120 = vpop.f32.mrb[0].mxu0
          %v2121 = vadd.f32 %v1382, %v2120
          %v2122 = vpop.f32.mrb[0].mxu0
          %2123 = vmatprep.mubr.bf16.mxu0 0
          %2124 = vmatmul.mubr.bf16.gmra.mrb[0].mxu0 %v1366
          %v2125 = vpop.f32.mrb[0].mxu0
          %v2126 = vadd.f32 %v1382, %v2125
          %v2127 = vpop.f32.mrb[0].mxu0
          %v2128 = vpop.f32.mrb[0].mxu0
          %v2129 = vadd.f32 %v1382, %v2128
          %v2130 = vpop.f32.mrb[0].mxu0
          %2131 = vmatprep.mubr.bf16.mxu0 0
          %2132 = vmatmul.mubr.bf16.gmra.mrb[0].mxu0 %v1367
          %v2133 = vpop.f32.mrb[0].mxu0
          %v2134 = vadd.f32 %v1382, %v2133
          %v2135 = vpop.f32.mrb[0].mxu0
          %v2136 = vpop.f32.mrb[0].mxu0
          %v2137 = vadd.f32 %v1382, %v2136
          %v2138 = vpop.f32.mrb[0].mxu0
          %2139 = vmatprep.mubr.bf16.mxu0 0
          %2140 = vmatmul.mubr.bf16.gmra.mrb[0].mxu0 %v1368
          %v2141 = vpop.f32.mrb[0].mxu0
          %v2142 = vadd.f32 %v1382, %v2141
          %v2143 = vpop.f32.mrb[0].mxu0
          %v2144 = vpop.f32.mrb[0].mxu0
          %v2145 = vadd.f32 %v1382, %v2144
          %v2146 = vpop.f32.mrb[0].mxu0
          %2147 = vmatprep.mubr.bf16.mxu0 0
          %2148 = vmatmul.mubr.bf16.gmra.mrb[0].mxu0 %v1369
          %v2149 = vpop.f32.mrb[0].mxu0
          %v2150 = vadd.f32 %v1382, %v2149
          %v2151 = vpop.f32.mrb[0].mxu0
          %v2152 = vpop.f32.mrb[0].mxu0
          %v2153 = vadd.f32 %v1382, %v2152
          %v2154 = vpop.f32.mrb[0].mxu0
          %2155 = vdwg.mxu0
          %v2156 = vpack.c.bf16 %v1553, %v1549
          %v2157 = vpack.c.bf16 %v1555, %v1551
          %v2158 = vpack.c.bf16 %v1905, %v1902
          %v2159 = vpack.c.bf16 %v1563, %v1559
          %v2160 = vpack.c.bf16 %v1565, %v1561
          %v2161 = vpack.c.bf16 %v1913, %v1910
          %v2162 = vpack.c.bf16 %v1573, %v1569
          %v2163 = vpack.c.bf16 %v1575, %v1571
          %v2164 = vpack.c.bf16 %v1921, %v1918
          %v2165 = vpack.c.bf16 %v1583, %v1579
          %v2166 = vpack.c.bf16 %v1585, %v1581
          %v2167 = vpack.c.bf16 %v1929, %v1926
          %v2168 = vpack.c.bf16 %v1593, %v1589
          %v2169 = vpack.c.bf16 %v1595, %v1591
          %v2170 = vpack.c.bf16 %v1937, %v1934
          %v2171 = vpack.c.bf16 %v1603, %v1599
          %v2172 = vpack.c.bf16 %v1605, %v1601
          %v2173 = vpack.c.bf16 %v1945, %v1942
          %v2174 = vpack.c.bf16 %v1613, %v1609
          %v2175 = vpack.c.bf16 %v1615, %v1611
          %v2176 = vpack.c.bf16 %v1953, %v1950
          %v2177 = vpack.c.bf16 %v1623, %v1619
          %v2178 = vpack.c.bf16 %v1625, %v1621
          %v2179 = vpack.c.bf16 %v1961, %v1958
          %v2180 = vpack.c.bf16 %v1633, %v1629
          %v2181 = vpack.c.bf16 %v1635, %v1631
          %v2182 = vpack.c.bf16 %v1969, %v1966
          %v2183 = vpack.c.bf16 %v1643, %v1639
          %v2184 = vpack.c.bf16 %v1645, %v1641
          %v2185 = vpack.c.bf16 %v1977, %v1974
          %v2186 = vpack.c.bf16 %v1653, %v1649
          %v2187 = vpack.c.bf16 %v1655, %v1651
          %v2188 = vpack.c.bf16 %v1985, %v1982
          %v2189 = vpack.c.bf16 %v1663, %v1659
          %v2190 = vpack.c.bf16 %v1665, %v1661
          %v2191 = vpack.c.bf16 %v1993, %v1990
          %v2192 = vpack.c.bf16 %v1673, %v1669
          %v2193 = vpack.c.bf16 %v1675, %v1671
          %v2194 = vpack.c.bf16 %v2001, %v1998
          %v2195 = vpack.c.bf16 %v1683, %v1679
          %v2196 = vpack.c.bf16 %v1685, %v1681
          %v2197 = vpack.c.bf16 %v2009, %v2006
          %v2198 = vpack.c.bf16 %v1693, %v1689
          %v2199 = vpack.c.bf16 %v1695, %v1691
          %v2200 = vpack.c.bf16 %v2017, %v2014
          %v2201 = vpack.c.bf16 %v1703, %v1699
          %v2202 = vpack.c.bf16 %v1705, %v1701
          %v2203 = vpack.c.bf16 %v2025, %v2022
          %v2204 = vpack.c.bf16 %v1713, %v1709
          %v2205 = vpack.c.bf16 %v1715, %v1711
          %v2206 = vpack.c.bf16 %v2033, %v2030
          %v2207 = vpack.c.bf16 %v1723, %v1719
          %v2208 = vpack.c.bf16 %v1725, %v1721
          %v2209 = vpack.c.bf16 %v2041, %v2038
          %v2210 = vpack.c.bf16 %v1733, %v1729
          %v2211 = vpack.c.bf16 %v1735, %v1731
          %v2212 = vpack.c.bf16 %v2049, %v2046
          %v2213 = vpack.c.bf16 %v1743, %v1739
          %v2214 = vpack.c.bf16 %v1745, %v1741
          %v2215 = vpack.c.bf16 %v2057, %v2054
          %v2216 = vpack.c.bf16 %v1753, %v1749
          %v2217 = vpack.c.bf16 %v1755, %v1751
          %v2218 = vpack.c.bf16 %v2065, %v2062
          %v2219 = vpack.c.bf16 %v1763, %v1759
          %v2220 = vpack.c.bf16 %v1765, %v1761
          %v2221 = vpack.c.bf16 %v2073, %v2070
          %v2222 = vpack.c.bf16 %v1773, %v1769
          %v2223 = vpack.c.bf16 %v1775, %v1771
          %v2224 = vpack.c.bf16 %v2081, %v2078
          %v2225 = vpack.c.bf16 %v1783, %v1779
          %v2226 = vpack.c.bf16 %v1785, %v1781
          %v2227 = vpack.c.bf16 %v2089, %v2086
          %v2228 = vpack.c.bf16 %v1793, %v1789
          %v2229 = vpack.c.bf16 %v1795, %v1791
          %v2230 = vpack.c.bf16 %v2097, %v2094
          %v2231 = vpack.c.bf16 %v1803, %v1799
          %v2232 = vpack.c.bf16 %v1805, %v1801
          %v2233 = vpack.c.bf16 %v2105, %v2102
          %v2234 = vpack.c.bf16 %v1813, %v1809
          %v2235 = vpack.c.bf16 %v1815, %v1811
          %v2236 = vpack.c.bf16 %v2113, %v2110
          %v2237 = vpack.c.bf16 %v1823, %v1819
          %v2238 = vpack.c.bf16 %v1825, %v1821
          %v2239 = vpack.c.bf16 %v2121, %v2118
          %v2240 = vpack.c.bf16 %v1833, %v1829
          %v2241 = vpack.c.bf16 %v1835, %v1831
          %v2242 = vpack.c.bf16 %v2129, %v2126
          %v2243 = vpack.c.bf16 %v1843, %v1839
          %v2244 = vpack.c.bf16 %v1845, %v1841
          %v2245 = vpack.c.bf16 %v2137, %v2134
          %v2246 = vpack.c.bf16 %v1853, %v1849
          %v2247 = vpack.c.bf16 %v1855, %v1851
          %v2248 = vpack.c.bf16 %v2145, %v2142
          %v2249 = vpack.c.bf16 %v1863, %v1859
          %v2250 = vpack.c.bf16 %v1865, %v1861
          %v2251 = vpack.c.bf16 %v2153, %v2150
          %v2348 = vunpack.c.l.b16 %v2156
          %v2349 = vunpack.c.l.b16 %v2157
          %v2350 = vunpack.c.l.b16 %v2158
          %v2351 = vunpack.c.h.b16 %v2156
          %v2352 = vunpack.c.h.b16 %v2157
          %v2353 = vunpack.c.h.b16 %v2158
          %v2354 = vunpack.c.l.b16 %v2159
          %v2355 = vunpack.c.l.b16 %v2160
          %v2356 = vunpack.c.l.b16 %v2161
          %v2357 = vunpack.c.h.b16 %v2159
          %v2358 = vunpack.c.h.b16 %v2160
          %v2359 = vunpack.c.h.b16 %v2161
          %v2360 = vunpack.c.l.b16 %v2162
          %v2361 = vunpack.c.l.b16 %v2163
          %v2362 = vunpack.c.l.b16 %v2164
          %v2363 = vunpack.c.h.b16 %v2162
          %v2364 = vunpack.c.h.b16 %v2163
          %v2365 = vunpack.c.h.b16 %v2164
          %v2366 = vunpack.c.l.b16 %v2165
          %v2367 = vunpack.c.l.b16 %v2166
          %v2368 = vunpack.c.l.b16 %v2167
          %v2369 = vunpack.c.h.b16 %v2165
          %v2370 = vunpack.c.h.b16 %v2166
          %v2371 = vunpack.c.h.b16 %v2167
          %v2372 = vunpack.c.l.b16 %v2168
          %v2373 = vunpack.c.l.b16 %v2169
          %v2374 = vunpack.c.l.b16 %v2170
          %v2375 = vunpack.c.h.b16 %v2168
          %v2376 = vunpack.c.h.b16 %v2169
          %v2377 = vunpack.c.h.b16 %v2170
          %v2378 = vunpack.c.l.b16 %v2171
          %v2379 = vunpack.c.l.b16 %v2172
          %v2380 = vunpack.c.l.b16 %v2173
          %v2381 = vunpack.c.h.b16 %v2171
          %v2382 = vunpack.c.h.b16 %v2172
          %v2383 = vunpack.c.h.b16 %v2173
          %v2384 = vunpack.c.l.b16 %v2174
          %v2385 = vunpack.c.l.b16 %v2175
          %v2386 = vunpack.c.l.b16 %v2176
          %v2387 = vunpack.c.h.b16 %v2174
          %v2388 = vunpack.c.h.b16 %v2175
          %v2389 = vunpack.c.h.b16 %v2176
          %v2390 = vunpack.c.l.b16 %v2177
          %v2391 = vunpack.c.l.b16 %v2178
          %v2392 = vunpack.c.l.b16 %v2179
          %v2393 = vunpack.c.h.b16 %v2177
          %v2394 = vunpack.c.h.b16 %v2178
          %v2395 = vunpack.c.h.b16 %v2179
          %v2396 = vunpack.c.l.b16 %v2180
          %v2397 = vunpack.c.l.b16 %v2181
          %v2398 = vunpack.c.l.b16 %v2182
          %v2399 = vunpack.c.h.b16 %v2180
          %v2400 = vunpack.c.h.b16 %v2181
          %v2401 = vunpack.c.h.b16 %v2182
          %v2402 = vunpack.c.l.b16 %v2183
          %v2403 = vunpack.c.l.b16 %v2184
          %v2404 = vunpack.c.l.b16 %v2185
          %v2405 = vunpack.c.h.b16 %v2183
          %v2406 = vunpack.c.h.b16 %v2184
          %v2407 = vunpack.c.h.b16 %v2185
          %v2408 = vunpack.c.l.b16 %v2186
          %v2409 = vunpack.c.l.b16 %v2187
          %v2410 = vunpack.c.l.b16 %v2188
          %v2411 = vunpack.c.h.b16 %v2186
          %v2412 = vunpack.c.h.b16 %v2187
          %v2413 = vunpack.c.h.b16 %v2188
          %v2414 = vunpack.c.l.b16 %v2189
          %v2415 = vunpack.c.l.b16 %v2190
          %v2416 = vunpack.c.l.b16 %v2191
          %v2417 = vunpack.c.h.b16 %v2189
          %v2418 = vunpack.c.h.b16 %v2190
          %v2419 = vunpack.c.h.b16 %v2191
          %v2420 = vunpack.c.l.b16 %v2192
          %v2421 = vunpack.c.l.b16 %v2193
          %v2422 = vunpack.c.l.b16 %v2194
          %v2423 = vunpack.c.h.b16 %v2192
          %v2424 = vunpack.c.h.b16 %v2193
          %v2425 = vunpack.c.h.b16 %v2194
          %v2426 = vunpack.c.l.b16 %v2195
          %v2427 = vunpack.c.l.b16 %v2196
          %v2428 = vunpack.c.l.b16 %v2197
          %v2429 = vunpack.c.h.b16 %v2195
          %v2430 = vunpack.c.h.b16 %v2196
          %v2431 = vunpack.c.h.b16 %v2197
          %v2432 = vunpack.c.l.b16 %v2198
          %v2433 = vunpack.c.l.b16 %v2199
          %v2434 = vunpack.c.l.b16 %v2200
          %v2435 = vunpack.c.h.b16 %v2198
          %v2436 = vunpack.c.h.b16 %v2199
          %v2437 = vunpack.c.h.b16 %v2200
          %v2438 = vunpack.c.l.b16 %v2201
          %v2439 = vunpack.c.l.b16 %v2202
          %v2440 = vunpack.c.l.b16 %v2203
          %v2441 = vunpack.c.h.b16 %v2201
          %v2442 = vunpack.c.h.b16 %v2202
          %v2443 = vunpack.c.h.b16 %v2203
          %v2444 = vunpack.c.l.b16 %v2204
          %v2445 = vunpack.c.l.b16 %v2205
          %v2446 = vunpack.c.l.b16 %v2206
          %v2447 = vunpack.c.h.b16 %v2204
          %v2448 = vunpack.c.h.b16 %v2205
          %v2449 = vunpack.c.h.b16 %v2206
          %v2450 = vunpack.c.l.b16 %v2207
          %v2451 = vunpack.c.l.b16 %v2208
          %v2452 = vunpack.c.l.b16 %v2209
          %v2453 = vunpack.c.h.b16 %v2207
          %v2454 = vunpack.c.h.b16 %v2208
          %v2455 = vunpack.c.h.b16 %v2209
          %v2456 = vunpack.c.l.b16 %v2210
          %v2457 = vunpack.c.l.b16 %v2211
          %v2458 = vunpack.c.l.b16 %v2212
          %v2459 = vunpack.c.h.b16 %v2210
          %v2460 = vunpack.c.h.b16 %v2211
          %v2461 = vunpack.c.h.b16 %v2212
          %v2462 = vunpack.c.l.b16 %v2213
          %v2463 = vunpack.c.l.b16 %v2214
          %v2464 = vunpack.c.l.b16 %v2215
          %v2465 = vunpack.c.h.b16 %v2213
          %v2466 = vunpack.c.h.b16 %v2214
          %v2467 = vunpack.c.h.b16 %v2215
          %v2468 = vunpack.c.l.b16 %v2216
          %v2469 = vunpack.c.l.b16 %v2217
          %v2470 = vunpack.c.l.b16 %v2218
          %v2471 = vunpack.c.h.b16 %v2216
          %v2472 = vunpack.c.h.b16 %v2217
          %v2473 = vunpack.c.h.b16 %v2218
          %v2474 = vunpack.c.l.b16 %v2219
          %v2475 = vunpack.c.l.b16 %v2220
          %v2476 = vunpack.c.l.b16 %v2221
          %v2477 = vunpack.c.h.b16 %v2219
          %v2478 = vunpack.c.h.b16 %v2220
          %v2479 = vunpack.c.h.b16 %v2221
          %v2480 = vunpack.c.l.b16 %v2222
          %v2481 = vunpack.c.l.b16 %v2223
          %v2482 = vunpack.c.l.b16 %v2224
          %v2483 = vunpack.c.h.b16 %v2222
          %v2484 = vunpack.c.h.b16 %v2223
          %v2485 = vunpack.c.h.b16 %v2224
          %v2486 = vunpack.c.l.b16 %v2225
          %v2487 = vunpack.c.l.b16 %v2226
          %v2488 = vunpack.c.l.b16 %v2227
          %v2489 = vunpack.c.h.b16 %v2225
          %v2490 = vunpack.c.h.b16 %v2226
          %v2491 = vunpack.c.h.b16 %v2227
          %v2492 = vunpack.c.l.b16 %v2228
          %v2493 = vunpack.c.l.b16 %v2229
          %v2494 = vunpack.c.l.b16 %v2230
          %v2495 = vunpack.c.h.b16 %v2228
          %v2496 = vunpack.c.h.b16 %v2229
          %v2497 = vunpack.c.h.b16 %v2230
          %v2498 = vunpack.c.l.b16 %v2231
          %v2499 = vunpack.c.l.b16 %v2232
          %v2500 = vunpack.c.l.b16 %v2233
          %v2501 = vunpack.c.h.b16 %v2231
          %v2502 = vunpack.c.h.b16 %v2232
          %v2503 = vunpack.c.h.b16 %v2233
          %v2504 = vunpack.c.l.b16 %v2234
          %v2505 = vunpack.c.l.b16 %v2235
          %v2506 = vunpack.c.l.b16 %v2236
          %v2507 = vunpack.c.h.b16 %v2234
          %v2508 = vunpack.c.h.b16 %v2235
          %v2509 = vunpack.c.h.b16 %v2236
          %v2510 = vunpack.c.l.b16 %v2237
          %v2511 = vunpack.c.l.b16 %v2238
          %v2512 = vunpack.c.l.b16 %v2239
          %v2513 = vunpack.c.h.b16 %v2237
          %v2514 = vunpack.c.h.b16 %v2238
          %v2515 = vunpack.c.h.b16 %v2239
          %v2516 = vunpack.c.l.b16 %v2240
          %v2517 = vunpack.c.l.b16 %v2241
          %v2518 = vunpack.c.l.b16 %v2242
          %v2519 = vunpack.c.h.b16 %v2240
          %v2520 = vunpack.c.h.b16 %v2241
          %v2521 = vunpack.c.h.b16 %v2242
          %v2522 = vunpack.c.l.b16 %v2243
          %v2523 = vunpack.c.l.b16 %v2244
          %v2524 = vunpack.c.l.b16 %v2245
          %v2525 = vunpack.c.h.b16 %v2243
          %v2526 = vunpack.c.h.b16 %v2244
          %v2527 = vunpack.c.h.b16 %v2245
          %v2528 = vunpack.c.l.b16 %v2246
          %v2529 = vunpack.c.l.b16 %v2247
          %v2530 = vunpack.c.l.b16 %v2248
          %v2531 = vunpack.c.h.b16 %v2246
          %v2532 = vunpack.c.h.b16 %v2247
          %v2533 = vunpack.c.h.b16 %v2248
          %v2534 = vunpack.c.l.b16 %v2249
          %v2535 = vunpack.c.l.b16 %v2250
          %v2536 = vunpack.c.l.b16 %v2251
          %v2537 = vunpack.c.h.b16 %v2249
          %v2538 = vunpack.c.h.b16 %v2250
          %v2539 = vunpack.c.h.b16 %v2251
          %v2540 = vpack.c.b16 %v2349, %v2348
          %v2541 = vpack.c.b16 %v2350, %v2350
          %v2542 = vpack.c.b16 %v2352, %v2351
          %v2543 = vpack.c.b16 %v2353, %v2353
          %v2544 = vpack.c.b16 %v2355, %v2354
          %v2545 = vpack.c.b16 %v2356, %v2356
          %v2546 = vpack.c.b16 %v2358, %v2357
          %v2547 = vpack.c.b16 %v2359, %v2359
          %v2548 = vpack.c.b16 %v2361, %v2360
          %v2549 = vpack.c.b16 %v2362, %v2362
          %v2550 = vpack.c.b16 %v2364, %v2363
          %v2551 = vpack.c.b16 %v2365, %v2365
          %v2552 = vpack.c.b16 %v2367, %v2366
          %v2553 = vpack.c.b16 %v2368, %v2368
          %v2554 = vpack.c.b16 %v2370, %v2369
          %v2555 = vpack.c.b16 %v2371, %v2371
          %v2556 = vpack.c.b16 %v2373, %v2372
          %v2557 = vpack.c.b16 %v2374, %v2374
          %v2558 = vpack.c.b16 %v2376, %v2375
          %v2559 = vpack.c.b16 %v2377, %v2377
          %v2560 = vpack.c.b16 %v2379, %v2378
          %v2561 = vpack.c.b16 %v2380, %v2380
          %v2562 = vpack.c.b16 %v2382, %v2381
          %v2563 = vpack.c.b16 %v2383, %v2383
          %v2564 = vpack.c.b16 %v2385, %v2384
          %v2565 = vpack.c.b16 %v2386, %v2386
          %v2566 = vpack.c.b16 %v2388, %v2387
          %v2567 = vpack.c.b16 %v2389, %v2389
          %v2568 = vpack.c.b16 %v2391, %v2390
          %v2569 = vpack.c.b16 %v2392, %v2392
          %v2570 = vpack.c.b16 %v2394, %v2393
          %v2571 = vpack.c.b16 %v2395, %v2395
          %v2572 = vpack.c.b16 %v2397, %v2396
          %v2573 = vpack.c.b16 %v2398, %v2398
          %v2574 = vpack.c.b16 %v2400, %v2399
          %v2575 = vpack.c.b16 %v2401, %v2401
          %v2576 = vpack.c.b16 %v2403, %v2402
          %v2577 = vpack.c.b16 %v2404, %v2404
          %v2578 = vpack.c.b16 %v2406, %v2405
          %v2579 = vpack.c.b16 %v2407, %v2407
          %v2580 = vpack.c.b16 %v2409, %v2408
          %v2581 = vpack.c.b16 %v2410, %v2410
          %v2582 = vpack.c.b16 %v2412, %v2411
          %v2583 = vpack.c.b16 %v2413, %v2413
          %v2584 = vpack.c.b16 %v2415, %v2414
          %v2585 = vpack.c.b16 %v2416, %v2416
          %v2586 = vpack.c.b16 %v2418, %v2417
          %v2587 = vpack.c.b16 %v2419, %v2419
          %v2588 = vpack.c.b16 %v2421, %v2420
          %v2589 = vpack.c.b16 %v2422, %v2422
          %v2590 = vpack.c.b16 %v2424, %v2423
          %v2591 = vpack.c.b16 %v2425, %v2425
          %v2592 = vpack.c.b16 %v2427, %v2426
          %v2593 = vpack.c.b16 %v2428, %v2428
          %v2594 = vpack.c.b16 %v2430, %v2429
          %v2595 = vpack.c.b16 %v2431, %v2431
          %v2596 = vpack.c.b16 %v2433, %v2432
          %v2597 = vpack.c.b16 %v2434, %v2434
          %v2598 = vpack.c.b16 %v2436, %v2435
          %v2599 = vpack.c.b16 %v2437, %v2437
          %v2600 = vpack.c.b16 %v2439, %v2438
          %v2601 = vpack.c.b16 %v2440, %v2440
          %v2602 = vpack.c.b16 %v2442, %v2441
          %v2603 = vpack.c.b16 %v2443, %v2443
          %v2604 = vpack.c.b16 %v2445, %v2444
          %v2605 = vpack.c.b16 %v2446, %v2446
          %v2606 = vpack.c.b16 %v2448, %v2447
          %v2607 = vpack.c.b16 %v2449, %v2449
          %v2608 = vpack.c.b16 %v2451, %v2450
          %v2609 = vpack.c.b16 %v2452, %v2452
          %v2610 = vpack.c.b16 %v2454, %v2453
          %v2611 = vpack.c.b16 %v2455, %v2455
          %v2612 = vpack.c.b16 %v2457, %v2456
          %v2613 = vpack.c.b16 %v2458, %v2458
          %v2614 = vpack.c.b16 %v2460, %v2459
          %v2615 = vpack.c.b16 %v2461, %v2461
          %v2616 = vpack.c.b16 %v2463, %v2462
          %v2617 = vpack.c.b16 %v2464, %v2464
          %v2618 = vpack.c.b16 %v2466, %v2465
          %v2619 = vpack.c.b16 %v2467, %v2467
          %v2620 = vpack.c.b16 %v2469, %v2468
          %v2621 = vpack.c.b16 %v2470, %v2470
          %v2622 = vpack.c.b16 %v2472, %v2471
          %v2623 = vpack.c.b16 %v2473, %v2473
          %v2624 = vpack.c.b16 %v2475, %v2474
          %v2625 = vpack.c.b16 %v2476, %v2476
          %v2626 = vpack.c.b16 %v2478, %v2477
          %v2627 = vpack.c.b16 %v2479, %v2479
          %v2628 = vpack.c.b16 %v2481, %v2480
          %v2629 = vpack.c.b16 %v2482, %v2482
          %v2630 = vpack.c.b16 %v2484, %v2483
          %v2631 = vpack.c.b16 %v2485, %v2485
          %v2632 = vpack.c.b16 %v2487, %v2486
          %v2633 = vpack.c.b16 %v2488, %v2488
          %v2634 = vpack.c.b16 %v2490, %v2489
          %v2635 = vpack.c.b16 %v2491, %v2491
          %v2636 = vpack.c.b16 %v2493, %v2492
          %v2637 = vpack.c.b16 %v2494, %v2494
          %v2638 = vpack.c.b16 %v2496, %v2495
          %v2639 = vpack.c.b16 %v2497, %v2497
          %v2640 = vpack.c.b16 %v2499, %v2498
          %v2641 = vpack.c.b16 %v2500, %v2500
          %v2642 = vpack.c.b16 %v2502, %v2501
          %v2643 = vpack.c.b16 %v2503, %v2503
          %v2644 = vpack.c.b16 %v2505, %v2504
          %v2645 = vpack.c.b16 %v2506, %v2506
          %v2646 = vpack.c.b16 %v2508, %v2507
          %v2647 = vpack.c.b16 %v2509, %v2509
          %v2648 = vpack.c.b16 %v2511, %v2510
          %v2649 = vpack.c.b16 %v2512, %v2512
          %v2650 = vpack.c.b16 %v2514, %v2513
          %v2651 = vpack.c.b16 %v2515, %v2515
          %v2652 = vpack.c.b16 %v2517, %v2516
          %v2653 = vpack.c.b16 %v2518, %v2518
          %v2654 = vpack.c.b16 %v2520, %v2519
          %v2655 = vpack.c.b16 %v2521, %v2521
          %v2656 = vpack.c.b16 %v2523, %v2522
          %v2657 = vpack.c.b16 %v2524, %v2524
          %v2658 = vpack.c.b16 %v2526, %v2525
          %v2659 = vpack.c.b16 %v2527, %v2527
          %v2660 = vpack.c.b16 %v2529, %v2528
          %v2661 = vpack.c.b16 %v2530, %v2530
          %v2662 = vpack.c.b16 %v2532, %v2531
          %v2663 = vpack.c.b16 %v2533, %v2533
          %v2664 = vpack.c.b16 %v2535, %v2534
          %v2665 = vpack.c.b16 %v2536, %v2536
          %v2666 = vpack.c.b16 %v2538, %v2537
          %v2667 = vpack.c.b16 %v2539, %v2539
          %s2796 = sshra.s32 %s996, 3
          %s2797 = sand.u32 %s996, 7
          %s2798 = smul.u32 %s2796, 3
          %s2799 = smul.addr %s2798, 4
          %s2800 = scalar_lea.vmem %s363, %s2799 [#allocation13]
          %2801 = vst [vmem:[%s2800] sm:$0xff] %v2540
          %2802 = vst [vmem:[%s2800 + $0x8] sm:$0xf] %v2541
          %2803 = vst [vmem:[%s2800 + $0xc] sm:$0xff] %v2542
          %2804 = vst [vmem:[%s2800 + $0x14] sm:$0xf] %v2543
          %2805 = vst [vmem:[%s2800 + $0x18] sm:$0xff] %v2544
          %2806 = vst [vmem:[%s2800 + $0x20] sm:$0xf] %v2545
          %2807 = vst [vmem:[%s2800 + $0x24] sm:$0xff] %v2546
          %2808 = vst [vmem:[%s2800 + $0x2c] sm:$0xf] %v2547
          %2809 = vst [vmem:[%s2800 + $0x30] sm:$0xff] %v2548
          %2810 = vst [vmem:[%s2800 + $0x38] sm:$0xf] %v2549
          %2811 = vst [vmem:[%s2800 + $0x3c] sm:$0xff] %v2550
          %2812 = vst [vmem:[%s2800 + $0x44] sm:$0xf] %v2551
          %2813 = vst [vmem:[%s2800 + $0x48] sm:$0xff] %v2552
          %2814 = vst [vmem:[%s2800 + $0x50] sm:$0xf] %v2553
          %2815 = vst [vmem:[%s2800 + $0x54] sm:$0xff] %v2554
          %2816 = vst [vmem:[%s2800 + $0x5c] sm:$0xf] %v2555
          %2817 = vst [vmem:[%s2800 + $0x60] sm:$0xff] %v2556
          %2818 = vst [vmem:[%s2800 + $0x68] sm:$0xf] %v2557
          %2819 = vst [vmem:[%s2800 + $0x6c] sm:$0xff] %v2558
          %2820 = vst [vmem:[%s2800 + $0x74] sm:$0xf] %v2559
          %2821 = vst [vmem:[%s2800 + $0x78] sm:$0xff] %v2560
          %2822 = vst [vmem:[%s2800 + $0x80] sm:$0xf] %v2561
          %2823 = vst [vmem:[%s2800 + $0x84] sm:$0xff] %v2562
          %2824 = vst [vmem:[%s2800 + $0x8c] sm:$0xf] %v2563
          %2825 = vst [vmem:[%s2800 + $0x90] sm:$0xff] %v2564
          %2826 = vst [vmem:[%s2800 + $0x98] sm:$0xf] %v2565
          %2827 = vst [vmem:[%s2800 + $0x9c] sm:$0xff] %v2566
          %2828 = vst [vmem:[%s2800 + $0xa4] sm:$0xf] %v2567
          %2829 = vst [vmem:[%s2800 + $0xa8] sm:$0xff] %v2568
          %2830 = vst [vmem:[%s2800 + $0xb0] sm:$0xf] %v2569
          %2831 = vst [vmem:[%s2800 + $0xb4] sm:$0xff] %v2570
          %2832 = vst [vmem:[%s2800 + $0xbc] sm:$0xf] %v2571
          %2833 = vst [vmem:[%s2800 + $0xc0] sm:$0xff] %v2572
          %2834 = vst [vmem:[%s2800 + $0xc8] sm:$0xf] %v2573
          %2835 = vst [vmem:[%s2800 + $0xcc] sm:$0xff] %v2574
          %2836 = vst [vmem:[%s2800 + $0xd4] sm:$0xf] %v2575
          %2837 = vst [vmem:[%s2800 + $0xd8] sm:$0xff] %v2576
          %2838 = vst [vmem:[%s2800 + $0xe0] sm:$0xf] %v2577
          %2839 = vst [vmem:[%s2800 + $0xe4] sm:$0xff] %v2578
          %2840 = vst [vmem:[%s2800 + $0xec] sm:$0xf] %v2579
          %2841 = vst [vmem:[%s2800 + $0xf0] sm:$0xff] %v2580
          %2842 = vst [vmem:[%s2800 + $0xf8] sm:$0xf] %v2581
          %2843 = vst [vmem:[%s2800 + $0xfc] sm:$0xff] %v2582
          %2844 = vst [vmem:[%s2800 + $0x104] sm:$0xf] %v2583
          %2845 = vst [vmem:[%s2800 + $0x108] sm:$0xff] %v2584
          %2846 = vst [vmem:[%s2800 + $0x110] sm:$0xf] %v2585
          %2847 = vst [vmem:[%s2800 + $0x114] sm:$0xff] %v2586
          %2848 = vst [vmem:[%s2800 + $0x11c] sm:$0xf] %v2587
          %2849 = vst [vmem:[%s2800 + $0x120] sm:$0xff] %v2588
          %2850 = vst [vmem:[%s2800 + $0x128] sm:$0xf] %v2589
          %2851 = vst [vmem:[%s2800 + $0x12c] sm:$0xff] %v2590
          %2852 = vst [vmem:[%s2800 + $0x134] sm:$0xf] %v2591
          %2853 = vst [vmem:[%s2800 + $0x138] sm:$0xff] %v2592
          %2854 = vst [vmem:[%s2800 + $0x140] sm:$0xf] %v2593
          %2855 = vst [vmem:[%s2800 + $0x144] sm:$0xff] %v2594
          %2856 = vst [vmem:[%s2800 + $0x14c] sm:$0xf] %v2595
          %2857 = vst [vmem:[%s2800 + $0x150] sm:$0xff] %v2596
          %2858 = vst [vmem:[%s2800 + $0x158] sm:$0xf] %v2597
          %2859 = vst [vmem:[%s2800 + $0x15c] sm:$0xff] %v2598
          %2860 = vst [vmem:[%s2800 + $0x164] sm:$0xf] %v2599
          %2861 = vst [vmem:[%s2800 + $0x168] sm:$0xff] %v2600
          %2862 = vst [vmem:[%s2800 + $0x170] sm:$0xf] %v2601
          %2863 = vst [vmem:[%s2800 + $0x174] sm:$0xff] %v2602
          %2864 = vst [vmem:[%s2800 + $0x17c] sm:$0xf] %v2603
          %2865 = vst [vmem:[%s2800 + $0x180] sm:$0xff] %v2604
          %2866 = vst [vmem:[%s2800 + $0x188] sm:$0xf] %v2605
          %2867 = vst [vmem:[%s2800 + $0x18c] sm:$0xff] %v2606
          %2868 = vst [vmem:[%s2800 + $0x194] sm:$0xf] %v2607
          %2869 = vst [vmem:[%s2800 + $0x198] sm:$0xff] %v2608
          %2870 = vst [vmem:[%s2800 + $0x1a0] sm:$0xf] %v2609
          %2871 = vst [vmem:[%s2800 + $0x1a4] sm:$0xff] %v2610
          %2872 = vst [vmem:[%s2800 + $0x1ac] sm:$0xf] %v2611
          %2873 = vst [vmem:[%s2800 + $0x1b0] sm:$0xff] %v2612
          %2874 = vst [vmem:[%s2800 + $0x1b8] sm:$0xf] %v2613
          %2875 = vst [vmem:[%s2800 + $0x1bc] sm:$0xff] %v2614
          %2876 = vst [vmem:[%s2800 + $0x1c4] sm:$0xf] %v2615
          %2877 = vst [vmem:[%s2800 + $0x1c8] sm:$0xff] %v2616
          %2878 = vst [vmem:[%s2800 + $0x1d0] sm:$0xf] %v2617
          %2879 = vst [vmem:[%s2800 + $0x1d4] sm:$0xff] %v2618
          %2880 = vst [vmem:[%s2800 + $0x1dc] sm:$0xf] %v2619
          %2881 = vst [vmem:[%s2800 + $0x1e0] sm:$0xff] %v2620
          %2882 = vst [vmem:[%s2800 + $0x1e8] sm:$0xf] %v2621
          %2883 = vst [vmem:[%s2800 + $0x1ec] sm:$0xff] %v2622
          %2884 = vst [vmem:[%s2800 + $0x1f4] sm:$0xf] %v2623
          %2885 = vst [vmem:[%s2800 + $0x1f8] sm:$0xff] %v2624
          %2886 = vst [vmem:[%s2800 + $0x200] sm:$0xf] %v2625
          %2887 = vst [vmem:[%s2800 + $0x204] sm:$0xff] %v2626
          %2888 = vst [vmem:[%s2800 + $0x20c] sm:$0xf] %v2627
          %2889 = vst [vmem:[%s2800 + $0x210] sm:$0xff] %v2628
          %2890 = vst [vmem:[%s2800 + $0x218] sm:$0xf] %v2629
          %2891 = vst [vmem:[%s2800 + $0x21c] sm:$0xff] %v2630
          %2892 = vst [vmem:[%s2800 + $0x224] sm:$0xf] %v2631
          %2893 = vst [vmem:[%s2800 + $0x228] sm:$0xff] %v2632
          %2894 = vst [vmem:[%s2800 + $0x230] sm:$0xf] %v2633
          %2895 = vst [vmem:[%s2800 + $0x234] sm:$0xff] %v2634
          %2896 = vst [vmem:[%s2800 + $0x23c] sm:$0xf] %v2635
          %2897 = vst [vmem:[%s2800 + $0x240] sm:$0xff] %v2636
          %2898 = vst [vmem:[%s2800 + $0x248] sm:$0xf] %v2637
          %2899 = vst [vmem:[%s2800 + $0x24c] sm:$0xff] %v2638
          %2900 = vst [vmem:[%s2800 + $0x254] sm:$0xf] %v2639
          %2901 = vst [vmem:[%s2800 + $0x258] sm:$0xff] %v2640
          %2902 = vst [vmem:[%s2800 + $0x260] sm:$0xf] %v2641
          %2903 = vst [vmem:[%s2800 + $0x264] sm:$0xff] %v2642
          %2904 = vst [vmem:[%s2800 + $0x26c] sm:$0xf] %v2643
          %2905 = vst [vmem:[%s2800 + $0x270] sm:$0xff] %v2644
          %2906 = vst [vmem:[%s2800 + $0x278] sm:$0xf] %v2645
          %2907 = vst [vmem:[%s2800 + $0x27c] sm:$0xff] %v2646
          %2908 = vst [vmem:[%s2800 + $0x284] sm:$0xf] %v2647
          %2909 = vst [vmem:[%s2800 + $0x288] sm:$0xff] %v2648
          %2910 = vst [vmem:[%s2800 + $0x290] sm:$0xf] %v2649
          %2911 = vst [vmem:[%s2800 + $0x294] sm:$0xff] %v2650
          %2912 = vst [vmem:[%s2800 + $0x29c] sm:$0xf] %v2651
          %2913 = vst [vmem:[%s2800 + $0x2a0] sm:$0xff] %v2652
          %2914 = vst [vmem:[%s2800 + $0x2a8] sm:$0xf] %v2653
          %2915 = vst [vmem:[%s2800 + $0x2ac] sm:$0xff] %v2654
          %2916 = vst [vmem:[%s2800 + $0x2b4] sm:$0xf] %v2655
          %2917 = vst [vmem:[%s2800 + $0x2b8] sm:$0xff] %v2656
          %2918 = vst [vmem:[%s2800 + $0x2c0] sm:$0xf] %v2657
          %2919 = vst [vmem:[%s2800 + $0x2c4] sm:$0xff] %v2658
          %2920 = vst [vmem:[%s2800 + $0x2cc] sm:$0xf] %v2659
          %2921 = vst [vmem:[%s2800 + $0x2d0] sm:$0xff] %v2660
          %2922 = vst [vmem:[%s2800 + $0x2d8] sm:$0xf] %v2661
          %2923 = vst [vmem:[%s2800 + $0x2dc] sm:$0xff] %v2662
          %2924 = vst [vmem:[%s2800 + $0x2e4] sm:$0xf] %v2663
          %2925 = vst [vmem:[%s2800 + $0x2e8] sm:$0xff] %v2664
          %2926 = vst [vmem:[%s2800 + $0x2f0] sm:$0xf] %v2665
          %2927 = vst [vmem:[%s2800 + $0x2f4] sm:$0xff] %v2666
          %2928 = vst [vmem:[%s2800 + $0x2fc] sm:$0xf] %v2667
        $region84: #{tpu_custom_call.1} parent=47 // loop_footer
          %s995 = sadd.s32 1, %s991
        $region85: #{tpu_custom_call.1} parent=47 // loop_footer_branch
          %990 = sbr.rel target = $region81
        $region86: #{tpu_custom_call.1} parent=47 // loop_exit
          _
        %s2929 = sand.u32 %s187, 1
        %s2930 = scalar_lea.sflag [#allocation4], %s2929
        %s2931 = sand.u32 %s187, 1
        %s2932 = smul.addr %s2931, 1536
        %s2933 = scalar_lea.vmem [#allocation13], %s2932
        // Predicated region
        $region87: #{tpu_custom_call.1} parent=47 // pred_check
          %p2934 = pneg %p197
        $region88: #{tpu_custom_call.1} parent=47 // pred_check_branch
          %2936 = sbr.rel (%p2934) target = $region90
        $region89: #{tpu_custom_call.1} parent=47 // pred_region
          %s2938 = ssub.s32 24576, 24576
          %2939 = vsyncadd %s2930, %s2938
          %s2940 = smul.addr %s27, 384
          %s2941 = smul.addr %s2940, 64
          %s2942 = scalar_lea.hbm %s7, %s2941
          %s2943 = sshll.u32 %s2933, 4
          %s2944 = int_to_ptr.vmem [resolvable:$true] %s2943
          %2949 = dma.vmem_to_hbm [thread:$0]  %s2944, 24576, %s2942, %s2930, 192, 192, 12
        $region90: #{tpu_custom_call.1} parent=47 // pred_fallthru
          _
      $region48: #{tpu_custom_call.1} parent=5 // pred_fallthru
        _
      %p2950 = scmp.le.s32.totalorder 2, %s22
      // Predicated region
      $region91: #{tpu_custom_call.1} parent=5 // pred_check
        %p2951 = pneg %p2950
      $region92: #{tpu_custom_call.1} parent=5 // pred_check_branch
        %2953 = sbr.rel (%p2951) target = $region94
      $region93: #{tpu_custom_call.1} parent=5 // pred_region
        %s2954 = ssub.s32 %s22, 2
        // Predicated region
        $region95: #{tpu_custom_call.1} parent=93 // pred_check
          %p2955 = pneg %p203
        $region96: #{tpu_custom_call.1} parent=93 // pred_check_branch
          %2957 = sbr.rel (%p2955) target = $region98
        $region97: #{tpu_custom_call.1} parent=93 // pred_region
          %s2958 = sand.u32 %s188, 1
          %s2959 = scalar_lea.sflag [#allocation4], %s2958
          %s2960 = sand.u32 %s188, 1
          %s2961 = smul.addr %s2960, 1536
          %s2962 = scalar_lea.vmem [#allocation13], %s2961
          %2963 = dma.done %s2959, 24576
        $region98: #{tpu_custom_call.1} parent=93 // pred_fallthru
          _
      $region94: #{tpu_custom_call.1} parent=5 // pred_fallthru
        _
    $region6: #{tpu_custom_call.1} parent=1 // loop_footer
      %s26 = sadd.s32 1, %s22
    $region7: #{tpu_custom_call.1} parent=1 // loop_footer_branch
      %21 = sbr.rel target = $region3
    $region8: #{tpu_custom_call.1} parent=1 // loop_exit
      _
    %2964 = vsyncpa [#allocation3], 1
    %s2965 = scalar_lea.sflag [#allocation3], 1
    %2966 = vsyncpa %s2965, 1
    %2967 = vsyncpa [#allocation6], 1
    %2968 = vsyncpa [#allocation9], 1
    %2969 = vsyncpa [#allocation12], 1
    %2970 = vsyncpa [#allocation4], 1
    %s2971 = scalar_lea.sflag [#allocation4], 1
    %2972 = vsyncpa %s2971, 1

</llo_original>
